<compile_context>
chip_gen: v7x
topology: tpu7x:2x2x1
jax: 0.10.0
libtpu: 0.0.40
codegen_flags: <defaults>
</compile_context>

<pallas_src>
import functools

import jax
import jax.numpy as jnp
from jax.experimental import pallas as pl
from jax.experimental.pallas import tpu as pltpu

EPS = 1e-5


# --------------------------------------------------------------------------- #
# Hardware-aware tiling helpers
# --------------------------------------------------------------------------- #
def _round_up(x, m):
    return ((x + m - 1) // m) * m


@functools.lru_cache(maxsize=None)
def _vmem_capacity_bytes():
    try:
        return int(pltpu.get_tpu_info().vmem_capacity_bytes)
    except Exception:
        return 128 * 1024 * 1024


def _vmem_limit_bytes():
    # v7x has 64 MiB VMEM/core -> leave headroom; v5e/v6e can go toward 128 MiB.
    return min(96 * 1024 * 1024, int(_vmem_capacity_bytes()) * 3 // 4)


def _row_tile_max():
    # Smaller row tiles on 64 MiB-VMEM chips (v7x), larger on v5e/v6e.
    return 256 if _vmem_capacity_bytes() <= 64 * 1024 * 1024 else 512


# --------------------------------------------------------------------------- #
# Pallas kernel 1: fused matmul + folded-BN shift + optional residual + ReLU
#   (used for the two 1x1 convs and the shortcut conv)
# --------------------------------------------------------------------------- #
def _matmul_bn_kernel(*refs, has_residual, relu):
    if has_residual:
        x_ref, w_ref, shift_ref, res_ref, o_ref = refs
    else:
        x_ref, w_ref, shift_ref, o_ref = refs
    acc = jnp.dot(x_ref[...], w_ref[...], preferred_element_type=jnp.float32)
    y = acc + shift_ref[...]
    if has_residual:
        y = y + res_ref[...].astype(jnp.float32)
    if relu:
        y = jnp.maximum(y, 0.0)
    o_ref[...] = y.astype(o_ref.dtype)


def matmul_bn(x2d, w, shift, *, residual=None, relu=True, out_dtype=None):
    """out = relu?( x2d @ w + shift (+ residual) ).

    x2d: (M, K); w: (K, N) with the BN scale already folded into its columns;
    shift: (N,) f32; residual: (M, N) or None.
    """
    M, K = x2d.shape
    Kw, N = w.shape
    assert K == Kw
    if out_dtype is None:
        out_dtype = x2d.dtype
    shift2 = shift.reshape(1, N).astype(jnp.float32)

    # Row (M) tiling: big tiles for HBM roofline, but keep >=2 parallel grid
    # steps so dual-TC chips shard the work; pad the ragged tail (no bm=M
    # fallback that could blow VMEM / collapse the grid to one step).
    bm = min(_row_tile_max(), _round_up(M, 8))
    if M > 256 and pl.cdiv(M, bm) < 2:
        bm = _round_up(pl.cdiv(M, 2), 8)
    Mp = pl.cdiv(M, bm) * bm
    mi = Mp // bm

    # Column (N) tiling only for very wide layers, so the weight / output /
    # residual blocks stay small on 64 MiB-VMEM chips.
    bn = 256 if (N > 512 and N % 256 == 0) else N
    nj = N // bn

    xp = x2d if Mp == M else jnp.pad(x2d, ((0, Mp - M), (0, 0)))
    args = [xp, w, shift2]
    if residual is not None:
        rp = residual if Mp == M else jnp.pad(residual, ((0, Mp - M), (0, 0)))
        args.append(rp)

    kernel = functools.partial(
        _matmul_bn_kernel, has_residual=residual is not None, relu=relu)

    def run(use_buffered):
        def const_spec(shape, idx):
            # Single-buffer blocks whose index never changes (kept resident).
            if use_buffered and nj == 1:
                return pl.BlockSpec(shape, idx, pipeline_mode=pl.Buffered(1))
            return pl.BlockSpec(shape, idx)

        in_specs = [
            pl.BlockSpec((bm, K), lambda j, i: (i, 0)),
            const_spec((K, bn), lambda j, i: (0, j)),
            const_spec((1, bn), lambda j, i: (0, j)),
        ]
        if residual is not None:
            in_specs.append(pl.BlockSpec((bm, bn), lambda j, i: (i, j)))
        return pl.pallas_call(
            kernel,
            out_shape=jax.ShapeDtypeStruct((Mp, N), out_dtype),
            grid=(nj, mi),
            in_specs=in_specs,
            out_specs=pl.BlockSpec((bm, bn), lambda j, i: (i, j)),
            compiler_params=pltpu.CompilerParams(
                dimension_semantics=("parallel", "parallel"),
                vmem_limit_bytes=_vmem_limit_bytes()),
        )(*args)

    try:
        out = run(True)
    except Exception:  # pl.Buffered(1) unsupported -> default double buffering
        out = run(False)
    return out if Mp == M else out[:M]


# --------------------------------------------------------------------------- #
# Pallas kernel 2: fused 3x3 conv (9 accumulating taps) + folded-BN + ReLU
#   No im2col patch tensor is ever written to HBM.
# --------------------------------------------------------------------------- #
def _conv3x3_bn_kernel(xp_ref, w_ref, shift_ref, o_ref, *, stride, hout, wout, relu):
    cin = xp_ref.shape[-1]
    cout = o_ref.shape[-1]
    acc = jnp.zeros((hout * wout, cout), jnp.float32)
    for kh in range(3):
        for kw in range(3):
            hsl = pl.ds(kh, hout) if stride == 1 else pl.ds(kh, hout, stride)
            wsl = pl.ds(kw, wout) if stride == 1 else pl.ds(kw, wout, stride)
            win = xp_ref[0, hsl, wsl, :]                 # shifted VMEM window
            tap = win.reshape(hout * wout, cin)
            acc = acc + jnp.dot(tap, w_ref[kh * 3 + kw],
                                preferred_element_type=jnp.float32)
    y = acc + shift_ref[...]
    if relu:
        y = jnp.maximum(y, 0.0)
    o_ref[0] = y.astype(o_ref.dtype)


def _conv3x3_bn_im2col(x_nhwc, w9, shift, *, stride, relu, out_dtype):
    # Last-resort fallback only (materializes im2col patches through XLA).
    n, h, w, cin = x_nhwc.shape
    cout = w9.shape[-1]
    hout = (h - 1) // stride + 1
    wout = (w - 1) // stride + 1
    pad = jnp.pad(x_nhwc, ((0, 0), (1, 1), (1, 1), (0, 0)))
    taps = []
    for kh in range(3):
        for kw in range(3):
            taps.append(pad[:, kh:kh + stride * (hout - 1) + 1:stride,
                            kw:kw + stride * (wout - 1) + 1:stride, :])
    patches = jnp.concatenate(taps, axis=-1).reshape(n * hout * wout, 9 * cin)
    out = matmul_bn(patches, w9.reshape(9 * cin, cout), shift,
                    relu=relu, out_dtype=out_dtype)
    return out.reshape(n, hout * wout, cout)


def conv3x3_bn(x_nhwc, w9, shift, *, stride=1, relu=True, out_dtype=None):
    """3x3 conv (padding=1, given stride) + folded BN (+ReLU).

    x_nhwc: (N, H, W, Cin); w9: (9, Cin, Cout) with BN scale folded in;
    shift: (Cout,) f32.  Returns (N, Hout*Wout, Cout).
    """
    n, h, w, cin = x_nhwc.shape
    cout = w9.shape[-1]
    if out_dtype is None:
        out_dtype = x_nhwc.dtype
    hout = (h - 1) // stride + 1
    wout = (w - 1) // stride + 1
    hp, wp = h + 2, w + 2
    xp = jnp.pad(x_nhwc, ((0, 0), (1, 1), (1, 1), (0, 0)))
    shift2 = shift.reshape(1, cout).astype(jnp.float32)

    kernel = functools.partial(
        _conv3x3_bn_kernel, stride=stride, hout=hout, wout=wout, relu=relu)

    # TODO(synk): for very large spatial extents, tile H with a 1-row halo via a
    # manual make_async_copy instead of staging the whole padded image per step.
    def run(use_buffered):
        def const_spec(shape, idx):
            if use_buffered:
                return pl.BlockSpec(shape, idx, pipeline_mode=pl.Buffered(1))
            return pl.BlockSpec(shape, idx)

        return pl.pallas_call(
            kernel,
            out_shape=jax.ShapeDtypeStruct((n, hout * wout, cout), out_dtype),
            grid=(n,),
            in_specs=[
                pl.BlockSpec((1, hp, wp, cin), lambda b: (b, 0, 0, 0)),
                const_spec((9, cin, cout), lambda b: (0, 0, 0)),
                const_spec((1, cout), lambda b: (0, 0)),
            ],
            out_specs=pl.BlockSpec((1, hout * wout, cout), lambda b: (b, 0, 0)),
            compiler_params=pltpu.CompilerParams(
                dimension_semantics=("parallel",),
                vmem_limit_bytes=_vmem_limit_bytes()),
        )(xp, w9, shift2)

    try:
        return run(True)
    except Exception:
        pass
    try:
        return run(False)
    except Exception:
        return _conv3x3_bn_im2col(x_nhwc, w9, shift, stride=stride,
                                  relu=relu, out_dtype=out_dtype)


# --------------------------------------------------------------------------- #
# Parameter construction (deterministic, synthetic) + BN folding
# --------------------------------------------------------------------------- #
def init_params(key, in_planes, planes, stride):
    expansion = 4
    ks = jax.random.split(key, 8)

    def conv_w(k, cout, cin, kh, kw):
        return jax.random.normal(k, (cout, cin, kh, kw), jnp.float32) * 0.1

    def bn_params(k, c):
        k1, k2, k3, k4 = jax.random.split(k, 4)
        gamma = jax.random.uniform(k1, (c,), jnp.float32, 0.5, 1.5)
        beta = jax.random.normal(k2, (c,), jnp.float32) * 0.1
        mean = jax.random.normal(k3, (c,), jnp.float32) * 0.1
        var = jax.random.uniform(k4, (c,), jnp.float32, 0.5, 1.5)
        return (gamma, beta, mean, var)

    raw = {
        "w1": conv_w(ks[0], planes, in_planes, 1, 1),
        "bn1": bn_params(ks[1], planes),
        "w2": conv_w(ks[2], planes, planes, 3, 3),
        "bn2": bn_params(ks[3], planes),
        "w3": conv_w(ks[4], expansion * planes, planes, 1, 1),
        "bn3": bn_params(ks[5], expansion * planes),
    }
    if stride != 1 or in_planes != expansion * planes:
        raw["ws"] = conv_w(ks[6], expansion * planes, in_planes, 1, 1)
        raw["bns"] = bn_params(ks[7], expansion * planes)
    return raw


def fold_bn(gamma, beta, mean, var):
    scale = gamma / jnp.sqrt(var + EPS)
    shift = beta - mean * scale
    return scale, shift


def fold_params(raw, compute_dtype=jnp.bfloat16):
    """Torch-layout conv weights -> matmul matrices with BN scale folded in."""
    p = {}
    s1, b1 = fold_bn(*raw["bn1"])
    p["w1"] = (jnp.transpose(raw["w1"][:, :, 0, 0], (1, 0)) * s1[None, :]).astype(compute_dtype)
    p["b1"] = b1

    s2, b2 = fold_bn(*raw["bn2"])
    cout2, cin2 = raw["w2"].shape[0], raw["w2"].shape[1]
    w2 = jnp.transpose(raw["w2"], (2, 3, 1, 0)).reshape(9, cin2, cout2)  # tap = kh*3+kw
    p["w2"] = (w2 * s2[None, None, :]).astype(compute_dtype)
    p["b2"] = b2

    s3, b3 = fold_bn(*raw["bn3"])
    p["w3"] = (jnp.transpose(raw["w3"][:, :, 0, 0], (1, 0)) * s3[None, :]).astype(compute_dtype)
    p["b3"] = b3

    if "ws" in raw:
        ss, bs = fold_bn(*raw["bns"])
        p["ws"] = (jnp.transpose(raw["ws"][:, :, 0, 0], (1, 0)) * ss[None, :]).astype(compute_dtype)
        p["bs"] = bs
    return p


# --------------------------------------------------------------------------- #
# Bottleneck forward (thin JAX glue, hot path entirely in Pallas kernels)
# --------------------------------------------------------------------------- #
def bottleneck_forward(x_nchw, params, stride=1, compute_dtype=jnp.bfloat16):
    n, cin, h, w = x_nchw.shape
    xh = jnp.transpose(x_nchw, (0, 2, 3, 1)).astype(compute_dtype)  # NHWC

    planes = params["w1"].shape[1]
    out_planes = params["w3"].shape[1]  # 4 * planes
    hout = (h - 1) // stride + 1
    wout = (w - 1) // stride + 1

    # conv1 (1x1) + bn1 + relu
    out1 = matmul_bn(xh.reshape(n * h * w, cin), params["w1"], params["b1"],
                     relu=True, out_dtype=compute_dtype).reshape(n, h, w, planes)
    # TODO(synk): fuse conv1 into the conv2 kernel per spatial tile (1-row halo)
    # so the (M, planes) intermediate never round-trips through HBM.

    # conv2 (3x3, pad=1, stride) + bn2 + relu — fused 9-tap accumulation
    out2 = conv3x3_bn(out1, params["w2"], params["b2"], stride=stride,
                      relu=True, out_dtype=compute_dtype)
    out2 = out2.reshape(n * hout * wout, planes)

    # shortcut
    if "ws" in params:
        if stride == 1:
            xs = xh.reshape(n * h * w, cin)
        else:
            # TODO(synk): express the stride in the shortcut matmul's input
            # BlockSpec/DMA instead of this XLA strided-slice copy.
            xs = xh[:, ::stride, ::stride, :].reshape(n * hout * wout, cin)
        shortcut = matmul_bn(xs, params["ws"], params["bs"], relu=False,
                             out_dtype=compute_dtype)
    else:
        shortcut = xh.reshape(n * hout * wout, out_planes)

    # conv3 (1x1) + bn3 + residual add + final relu, fused in one kernel
    out = matmul_bn(out2, params["w3"], params["b3"], residual=shortcut,
                    relu=True, out_dtype=jnp.float32)
    out = out.reshape(n, hout, wout, out_planes)
    return jnp.transpose(out, (0, 3, 1, 2)).astype(x_nchw.dtype)  # back to NCHW


# --------------------------------------------------------------------------- #
# Pure-JAX reference (lax.conv) for correctness check
# --------------------------------------------------------------------------- #
def reference_forward(x, raw, stride=1):
    def conv(x, w, s=1, p=0):
        return jax.lax.conv_general_dilated(
            x, w, (s, s), [(p, p), (p, p)],
            dimension_numbers=("NCHW", "OIHW", "NCHW"))

    def bn(x, bnp):
        gamma, beta, mean, var = bnp
        sc = gamma / jnp.sqrt(var + EPS)
        sh = beta - mean * sc
        return x * sc[None, :, None, None] + sh[None, :, None, None]

    out = jax.nn.relu(bn(conv(x, raw["w1"]), raw["bn1"]))
    out = jax.nn.relu(bn(conv(out, raw["w2"], stride, 1), raw["bn2"]))
    out = bn(conv(out, raw["w3"]), raw["bn3"])
    sc = bn(conv(x, raw["ws"], stride), raw["bns"]) if "ws" in raw else x
    return jax.nn.relu(out + sc)


# --------------------------------------------------------------------------- #
if __name__ == "__main__":
    key = jax.random.PRNGKey(0)
    kx, kp = jax.random.split(key)

    # NOTE: real ResNet deployments use >=128 channels (lane-dense stores); the
    # tiny demo channel counts (4 / 16) just keep the check fast.
    batch, in_planes, planes, spatial, stride = 2, 4, 4, 16, 1
    x = jax.random.normal(kx, (batch, in_planes, spatial, spatial), jnp.float32)

    raw = init_params(kp, in_planes, planes, stride)
    ref = jax.block_until_ready(reference_forward(x, raw, stride=stride))

    # Exact f32 path: tight check against the lax.conv reference.
    out_f32 = bottleneck_forward(x, fold_params(raw, jnp.float32),
                                 stride=stride, compute_dtype=jnp.float32)
    out_f32 = jax.block_until_ready(out_f32)
    assert out_f32.shape == ref.shape == (batch, 4 * planes, spatial, spatial)
    assert jnp.allclose(out_f32, ref, atol=1e-4, rtol=1e-4), \
        float(jnp.max(jnp.abs(out_f32 - ref)))

    # bf16 path (default fast path: halves HBM traffic, doubles MXU rate on
    # v6e/v7x; f32 accumulation + f32 epilogue): loose numerical check.
    out_bf16 = bottleneck_forward(x, fold_params(raw, jnp.bfloat16),
                                  stride=stride, compute_dtype=jnp.bfloat16)
    out_bf16 = jax.block_until_ready(out_bf16)
    bf16_err = float(jnp.max(jnp.abs(out_bf16.astype(jnp.float32) - ref)))
    assert bf16_err < 0.15, bf16_err

    print("KERNEL_OK")
</pallas_src>

<mosaic_0001>
module attributes {stable_mosaic.version = 11 : i64} {
  func.func @_matmul_bn_kernel(%arg0: i32, %arg1: i32, %arg2: memref<256x4xf32, #tpu.memory_space<vmem>>, %arg3: memref<4x4xf32, #tpu.memory_space<vmem>>, %arg4: memref<1x4xf32, #tpu.memory_space<vmem>>, %arg5: memref<256x4xf32, #tpu.memory_space<vmem>>) attributes {dimension_semantics = [#tpu.dimension_semantics<parallel>, #tpu.dimension_semantics<parallel>], iteration_bounds = array<i64: 1, 2>, scalar_prefetch = 0 : i64, scratch_operands = 0 : i64, tpu.core_type = #tpu.core_type<tc>, window_params = [{transform_indices = @transform_0, window_bounds = array<i64: 256, 4>}, {pipeline_mode = #tpu.pipeline_mode<synchronous>, transform_indices = @transform_1, window_bounds = array<i64: 4, 4>}, {pipeline_mode = #tpu.pipeline_mode<synchronous>, transform_indices = @transform_2, window_bounds = array<i64: 1, 4>}, {transform_indices = @transform_3, window_bounds = array<i64: 256, 4>}]} {
    %c0 = arith.constant 0 : index
    %c0_0 = arith.constant 0 : index
    %0 = vector.load %arg2[%c0, %c0_0] : memref<256x4xf32, #tpu.memory_space<vmem>>, vector<256x4xf32>
    %c0_1 = arith.constant 0 : index
    %c0_2 = arith.constant 0 : index
    %1 = vector.load %arg3[%c0_1, %c0_2] : memref<4x4xf32, #tpu.memory_space<vmem>>, vector<4x4xf32>
    %cst = arith.constant dense<0.000000e+00> : vector<256x4xf32>
    %2 = tpu.matmul %0, %1, %cst {dimension_numbers = #tpu.dot_dimension_numbers<[1], [0], [0], [1], [0, 0, 1, 1], [], []>} : vector<256x4xf32>, vector<4x4xf32>, vector<256x4xf32> -> vector<256x4xf32>
    %c0_3 = arith.constant 0 : index
    %c0_4 = arith.constant 0 : index
    %3 = vector.load %arg4[%c0_3, %c0_4] : memref<1x4xf32, #tpu.memory_space<vmem>>, vector<1x4xf32>
    %4 = vector.broadcast %3 : vector<1x4xf32> to vector<256x4xf32>
    %5 = arith.addf %2, %4 : vector<256x4xf32>
    %cst_5 = arith.constant 0.000000e+00 : f32
    %6 = vector.broadcast %cst_5 : f32 to vector<256x4xf32>
    %7 = arith.maximumf %5, %6 : vector<256x4xf32>
    %c0_6 = arith.constant 0 : index
    %c0_7 = arith.constant 0 : index
    %8 = vector.load %arg5[%c0_6, %c0_7] : memref<256x4xf32, #tpu.memory_space<vmem>>, vector<256x4xf32>
    tpu.vector_store %arg5[%c0_6, %c0_7], %7 {strides = array<i32>} : memref<256x4xf32, #tpu.memory_space<vmem>>, vector<256x4xf32>,
    return
  }
  func.func @transform_0(%arg0: i32, %arg1: i32) -> (i32, i32) {
    %c0_i32 = arith.constant 0 : i32
    %c0_i32_0 = arith.constant 0 : i32
    return %arg1, %c0_i32 : i32, i32
  }
  func.func @transform_1(%arg0: i32, %arg1: i32) -> (i32, i32) {
    %c0_i32 = arith.constant 0 : i32
    %c0_i32_0 = arith.constant 0 : i32
    return %c0_i32, %arg0 : i32, i32
  }
  func.func @transform_2(%arg0: i32, %arg1: i32) -> (i32, i32) {
    %c0_i32 = arith.constant 0 : i32
    %c0_i32_0 = arith.constant 0 : i32
    return %c0_i32, %arg0 : i32, i32
  }
  func.func @transform_3(%arg0: i32, %arg1: i32) -> (i32, i32) {
    %c0_i32 = arith.constant 0 : i32
    return %arg1, %arg0 : i32, i32
  }
}

module attributes {stable_mosaic.version = 11 : i64} {
  func.func @_matmul_bn_kernel(%arg0: i32, %arg1: i32, %arg2: memref<256x4xf32, #tpu.memory_space<vmem>>, %arg3: memref<4x4xf32, #tpu.memory_space<vmem>>, %arg4: memref<1x4xf32, #tpu.memory_space<vmem>>, %arg5: memref<256x4xf32, #tpu.memory_space<vmem>>) attributes {dimension_semantics = [#tpu.dimension_semantics<parallel>, #tpu.dimension_semantics<parallel>], iteration_bounds = array<i64: 1, 2>, scalar_prefetch = 0 : i64, scratch_operands = 0 : i64, tpu.core_type = #tpu.core_type<tc>, window_params = [{transform_indices = @transform_0, window_bounds = array<i64: 256, 4>}, {transform_indices = @transform_1, window_bounds = array<i64: 4, 4>}, {transform_indices = @transform_2, window_bounds = array<i64: 1, 4>}, {transform_indices = @transform_3, window_bounds = array<i64: 256, 4>}]} {
    %c0 = arith.constant 0 : index
    %c0_0 = arith.constant 0 : index
    %0 = vector.load %arg2[%c0, %c0_0] : memref<256x4xf32, #tpu.memory_space<vmem>>, vector<256x4xf32>
    %c0_1 = arith.constant 0 : index
    %c0_2 = arith.constant 0 : index
    %1 = vector.load %arg3[%c0_1, %c0_2] : memref<4x4xf32, #tpu.memory_space<vmem>>, vector<4x4xf32>
    %cst = arith.constant dense<0.000000e+00> : vector<256x4xf32>
    %2 = tpu.matmul %0, %1, %cst {dimension_numbers = #tpu.dot_dimension_numbers<[1], [0], [0], [1], [0, 0, 1, 1], [], []>} : vector<256x4xf32>, vector<4x4xf32>, vector<256x4xf32> -> vector<256x4xf32>
    %c0_3 = arith.constant 0 : index
    %c0_4 = arith.constant 0 : index
    %3 = vector.load %arg4[%c0_3, %c0_4] : memref<1x4xf32, #tpu.memory_space<vmem>>, vector<1x4xf32>
    %4 = vector.broadcast %3 : vector<1x4xf32> to vector<256x4xf32>
    %5 = arith.addf %2, %4 : vector<256x4xf32>
    %cst_5 = arith.constant 0.000000e+00 : f32
    %6 = vector.broadcast %cst_5 : f32 to vector<256x4xf32>
    %7 = arith.maximumf %5, %6 : vector<256x4xf32>
    %c0_6 = arith.constant 0 : index
    %c0_7 = arith.constant 0 : index
    %8 = vector.load %arg5[%c0_6, %c0_7] : memref<256x4xf32, #tpu.memory_space<vmem>>, vector<256x4xf32>
    tpu.vector_store %arg5[%c0_6, %c0_7], %7 {strides = array<i32>} : memref<256x4xf32, #tpu.memory_space<vmem>>, vector<256x4xf32>,
    return
  }
  func.func @transform_0(%arg0: i32, %arg1: i32) -> (i32, i32) {
    %c0_i32 = arith.constant 0 : i32
    %c0_i32_0 = arith.constant 0 : i32
    return %arg1, %c0_i32 : i32, i32
  }
  func.func @transform_1(%arg0: i32, %arg1: i32) -> (i32, i32) {
    %c0_i32 = arith.constant 0 : i32
    %c0_i32_0 = arith.constant 0 : i32
    return %c0_i32, %arg0 : i32, i32
  }
  func.func @transform_2(%arg0: i32, %arg1: i32) -> (i32, i32) {
    %c0_i32 = arith.constant 0 : i32
    %c0_i32_0 = arith.constant 0 : i32
    return %c0_i32, %arg0 : i32, i32
  }
  func.func @transform_3(%arg0: i32, %arg1: i32) -> (i32, i32) {
    %c0_i32 = arith.constant 0 : i32
    return %arg1, %arg0 : i32, i32
  }
}

</mosaic_0001>

<llo_original>
// kernel: tpu_custom_call.1
$region0: #{tpu_custom_call.1}
  #allocation0 [shape = 'u32[]', space=smem, size = 0x4, offset = 0x4, fixed_abs, tag = 'smem constant byte address 0x4 - core index']
  #allocation1 [shape = 'u32[144,128]{1,0:T(1,128)}', space=vmem, size = 0x12000, scoped, tag = 'internal scratch']
  %s0 = inlined_call_operand.hbm [shape: f32[512,4], index: 0, kind: input, shape index: {}]
  %s1 = inlined_call_operand.hbm [shape: f32[4,4], index: 1, kind: input, shape index: {}]
  %s2 = inlined_call_operand.hbm [shape: f32[1,4], index: 2, kind: input, shape index: {}]
  %s3 = inlined_call_operand.hbm [shape: f32[512,4], index: 3, kind: output, shape index: {}]
  %s4 = sld [smem:[#allocation0]]
  $region57: #{tpu_custom_call.1} parent=0
    _
  %s6 = ssub.s32 1, %s4
  %s7 = scalar_select 0, %s6, %s4
  $region1: #{tpu_custom_call.1} parent=0
    #allocation2 [shape = 'u8[262144]{0}', space=vmem, size = 0x40000, scoped, tag = 'input window, operand 0']
    #allocation3 [shape = 's32[2]{0}', space=sflag, size = 0x8, scoped, tag = 'scoped memory for tpu_custom_call.1']
    #allocation4 [shape = 's32[2]{0}', space=sflag, size = 0x8, scoped, tag = 'scoped memory for tpu_custom_call.1']
    #allocation5 [shape = 'u8[2048]{0}', space=vmem, size = 0x800, scoped, tag = 'input window, operand 1, single buffered']
    #allocation6 [shape = 's32[1]{0}', space=sflag, size = 0x4, scoped, tag = 'scoped memory for tpu_custom_call.1']
    #allocation7 [shape = 'u8[512]{0}', space=vmem, size = 0x400, scoped, tag = 'input window, operand 2, single buffered']
    #allocation8 [shape = 'u8[262144]{0}', space=vmem, size = 0x40000, scoped, tag = 'output window, operand 0']
    %8 = vsyncpa [#allocation3], 0
    %s9 = scalar_lea.sflag [#allocation3], 1
    %10 = vsyncpa %s9, 0
    %11 = vsyncpa [#allocation6], 0
    %12 = vsyncpa [#allocation4], 0
    %s13 = scalar_lea.sflag [#allocation4], 1
    %14 = vsyncpa %s13, 0
    loop: start=0, step=1, limit=4
    $region2: #{tpu_custom_call.1} parent=1 // loop_pre_header
      _
    $region3: #{tpu_custom_call.1} parent=1 // loop_header
      %s16 = sphi 0, %s20
      %p17 = scmp.ge.s32.totalorder %s16, 4
      %s23 = sphi 0, %s35
      %s24 = sphi 0, %s31
      %s25 = sphi 0, %s23
      %s26 = sphi 0, %s24
      %s27 = sphi 0, %s25
      %s28 = sphi 0, %s26
      %s38 = sphi 0, %s40
      %s41 = sphi 0, %s38
      %s42 = sphi 0, %s41
      %s58 = sphi 0, %s42
      %s64 = sphi 0, %s66
      %s67 = sphi 0, %s64
      %s68 = sphi 0, %s67
      %s84 = sphi 0, %s68
      %s90 = sphi 0, %s92
      %s93 = sphi 0, %s90
      %s94 = sphi 0, %s93
      %s110 = sphi 0, %s94
      %s118 = sphi 0, %s120
      %s121 = sphi 0, %s118
      %s122 = sphi 0, %s121
      %s138 = sphi 0, %s122
    $region4: #{tpu_custom_call.1} parent=1 // loop_header_branch
      %19 = sbr.rel (%p17) target = $region8
    $region5: #{tpu_custom_call.1} parent=1 // loop_body
      %s21 = ssub.s32 %s16, 1
      %s22 = ssub.s32 %s16, 2
      %s29 = sadd.s32 1, %s24
      %p30 = scmp.ge.s32.totalorder %s29, 2
      %s31 = scalar_select %p30, 0, %s29
      %s32 = sadd.s32 1, %s23
      %s33 = scalar_select %p30, %s32, %s23
      %p34 = scmp.ge.s32.totalorder %s33, 1
      %s35 = scalar_select %p34, 0, %s33
      %s36 = ssub.s32 %s24, %s31
      %p37 = scmp.eq.s32.totalorder %s36, 0
      %s39 = sadd.s32 %s38, 1
      %s40 = scalar_select %p37, %s38, %s39
      %p43 = pneg %p37
      %p44 = scmp.eq.s32.totalorder %s16, 1
      %p45 = por %p43, %p44
      %p46 = scmp.ne.s32.totalorder %s38, %s41
      %p47 = scmp.eq.s32.totalorder %s16, 0
      %p48 = por %p46, %p47
      %p49 = scmp.ne.s32.totalorder %s38, %s41
      %p50 = scmp.eq.s32.totalorder %s21, 1
      %p51 = por %p49, %p50
      %p52 = scmp.ne.s32.totalorder %s41, %s42
      %p53 = scmp.eq.s32.totalorder %s21, 0
      %p54 = por %p52, %p53
      %p55 = scmp.ne.s32.totalorder %s41, %s42
      %p56 = scmp.eq.s32.totalorder %s22, 1
      %p57 = por %p55, %p56
      %p59 = scmp.ne.s32.totalorder %s42, %s58
      %p60 = scmp.eq.s32.totalorder %s22, 0
      %p61 = por %p59, %p60
      %s62 = ssub.s32 %s23, %s35
      %p63 = scmp.eq.s32.totalorder %s62, 0
      %s65 = sadd.s32 %s64, 1
      %s66 = scalar_select %p63, %s64, %s65
      %p69 = pneg %p63
      %p70 = scmp.eq.s32.totalorder %s16, 1
      %p71 = por %p69, %p70
      %p72 = scmp.ne.s32.totalorder %s64, %s67
      %p73 = scmp.eq.s32.totalorder %s16, 0
      %p74 = por %p72, %p73
      %p75 = scmp.ne.s32.totalorder %s64, %s67
      %p76 = scmp.eq.s32.totalorder %s21, 1
      %p77 = por %p75, %p76
      %p78 = scmp.ne.s32.totalorder %s67, %s68
      %p79 = scmp.eq.s32.totalorder %s21, 0
      %p80 = por %p78, %p79
      %p81 = scmp.ne.s32.totalorder %s67, %s68
      %p82 = scmp.eq.s32.totalorder %s22, 1
      %p83 = por %p81, %p82
      %p85 = scmp.ne.s32.totalorder %s68, %s84
      %p86 = scmp.eq.s32.totalorder %s22, 0
      %p87 = por %p85, %p86
      %s88 = ssub.s32 %s23, %s35
      %p89 = scmp.eq.s32.totalorder %s88, 0
      %s91 = sadd.s32 %s90, 1
      %s92 = scalar_select %p89, %s90, %s91
      %p95 = pneg %p89
      %p96 = scmp.eq.s32.totalorder %s16, 1
      %p97 = por %p95, %p96
      %p98 = scmp.ne.s32.totalorder %s90, %s93
      %p99 = scmp.eq.s32.totalorder %s16, 0
      %p100 = por %p98, %p99
      %p101 = scmp.ne.s32.totalorder %s90, %s93
      %p102 = scmp.eq.s32.totalorder %s21, 1
      %p103 = por %p101, %p102
      %p104 = scmp.ne.s32.totalorder %s93, %s94
      %p105 = scmp.eq.s32.totalorder %s21, 0
      %p106 = por %p104, %p105
      %p107 = scmp.ne.s32.totalorder %s93, %s94
      %p108 = scmp.eq.s32.totalorder %s22, 1
      %p109 = por %p107, %p108
      %p111 = scmp.ne.s32.totalorder %s94, %s110
      %p112 = scmp.eq.s32.totalorder %s22, 0
      %p113 = por %p111, %p112
      %s114 = ssub.s32 %s24, %s31
      %s115 = ssub.s32 %s23, %s35
      %s116 = sor.u32 %s114, %s115
      %p117 = scmp.eq.s32.totalorder %s116, 0
      %s119 = sadd.s32 %s118, 1
      %s120 = scalar_select %p117, %s118, %s119
      %p123 = pneg %p117
      %p124 = scmp.eq.s32.totalorder %s16, 1
      %p125 = por %p123, %p124
      %p126 = scmp.ne.s32.totalorder %s118, %s121
      %p127 = scmp.eq.s32.totalorder %s16, 0
      %p128 = por %p126, %p127
      %p129 = scmp.ne.s32.totalorder %s118, %s121
      %p130 = scmp.eq.s32.totalorder %s21, 1
      %p131 = por %p129, %p130
      %p132 = scmp.ne.s32.totalorder %s121, %s122
      %p133 = scmp.eq.s32.totalorder %s21, 0
      %p134 = por %p132, %p133
      %p135 = scmp.ne.s32.totalorder %s121, %s122
      %p136 = scmp.eq.s32.totalorder %s22, 1
      %p137 = por %p135, %p136
      %p139 = scmp.ne.s32.totalorder %s122, %s138
      %p140 = scmp.eq.s32.totalorder %s22, 0
      %p141 = por %p139, %p140
      %p142 = scmp.le.s32.totalorder 1, %s16
      %p143 = scmp.lt.s32.totalorder %s16, 3
      %p144 = pnand %p142, %p143
      %p145 = pneg %p144
      // Predicated region
      $region9: #{tpu_custom_call.1} parent=5 // pred_check
        _
      $region10: #{tpu_custom_call.1} parent=5 // pred_check_branch
        %147 = sbr.rel (%p144) target = $region12
      $region11: #{tpu_custom_call.1} parent=5 // pred_region
        %s148 = ssub.s32 %s16, 1
        // Predicated region
        $region13: #{tpu_custom_call.1} parent=11 // pred_check
          %p149 = pneg %p80
        $region14: #{tpu_custom_call.1} parent=11 // pred_check_branch
          %151 = sbr.rel (%p149) target = $region16
        $region15: #{tpu_custom_call.1} parent=11 // pred_region
          %s153 = ssub.s32 64, 64
          %154 = vsyncadd [#allocation6], %s153
          %s155 = smul.addr %s25, 64
          %s156 = scalar_lea.hbm %s1, %s155
          %s158 = sshll.u32 [#allocation5], 4
          %s159 = int_to_ptr.vmem [resolvable:$true] %s158
          %161 = dma.hbm_to_vmem [thread:$0]  %s156, 64, %s159, [#allocation6]
        $region16: #{tpu_custom_call.1} parent=11 // pred_fallthru
          _
        // Predicated region
        $region17: #{tpu_custom_call.1} parent=11 // pred_check
          %p162 = pneg %p106
        $region18: #{tpu_custom_call.1} parent=11 // pred_check_branch
          %164 = sbr.rel (%p162) target = $region20
        $region19: #{tpu_custom_call.1} parent=11 // pred_region
          %s166 = ssub.s32 16, 16
          %167 = vsyncadd [#allocation6], %s166
          %s168 = smul.addr %s25, 16
          %s169 = scalar_lea.hbm %s2, %s168
          %s171 = sshll.u32 [#allocation7], 4
          %s172 = int_to_ptr.vmem [resolvable:$true] %s171
          %174 = dma.hbm_to_vmem [thread:$0]  %s169, 16, %s172, [#allocation6]
        $region20: #{tpu_custom_call.1} parent=11 // pred_fallthru
          _
      $region12: #{tpu_custom_call.1} parent=5 // pred_fallthru
        _
      %p175 = scmp.lt.s32.totalorder %s16, 2
      // Predicated region
      $region21: #{tpu_custom_call.1} parent=5 // pred_check
        %p176 = pneg %p175
      $region22: #{tpu_custom_call.1} parent=5 // pred_check_branch
        %178 = sbr.rel (%p176) target = $region24
      $region23: #{tpu_custom_call.1} parent=5 // pred_region
        // Predicated region
        $region25: #{tpu_custom_call.1} parent=23 // pred_check
          %p179 = pneg %p48
        $region26: #{tpu_custom_call.1} parent=23 // pred_check_branch
          %181 = sbr.rel (%p179) target = $region28
        $region27: #{tpu_custom_call.1} parent=23 // pred_region
          %s182 = sand.u32 %s38, 1
          %s183 = scalar_lea.sflag [#allocation3], %s182
          %s184 = sand.u32 %s38, 1
          %s185 = smul.addr %s184, 256
          %s186 = scalar_lea.vmem [#allocation2], %s185
          %s187 = smul.u32 32, %s24
          %s189 = ssub.s32 4096, 4096
          %190 = vsyncadd %s183, %s189
          %s191 = smul.addr %s187, 128
          %s192 = scalar_lea.hbm %s0, %s191
          %s193 = sshll.u32 %s186, 4
          %s194 = int_to_ptr.vmem [resolvable:$true] %s193
          %199 = dma.hbm_to_vmem [thread:$0]  %s192, 4096, %s194, %s183, 128, 128, 8
        $region28: #{tpu_custom_call.1} parent=23 // pred_fallthru
          _
      $region24: #{tpu_custom_call.1} parent=5 // pred_fallthru
        _
      %p200 = scmp.le.s32.totalorder 1, %s16
      %p201 = scmp.lt.s32.totalorder %s16, 3
      %p202 = pnand %p200, %p201
      %p203 = pneg %p202
      // Predicated region
      $region29: #{tpu_custom_call.1} parent=5 // pred_check
        _
      $region30: #{tpu_custom_call.1} parent=5 // pred_check_branch
        %205 = sbr.rel (%p202) target = $region32
      $region31: #{tpu_custom_call.1} parent=5 // pred_region
        %s206 = ssub.s32 %s16, 1
        %s207 = sand.u32 %s41, 1
        %s208 = scalar_lea.sflag [#allocation3], %s207
        %s209 = sand.u32 %s41, 1
        %s210 = smul.addr %s209, 256
        %s211 = scalar_lea.vmem [#allocation2], %s210
        // Predicated region
        $region33: #{tpu_custom_call.1} parent=31 // pred_check
          %p212 = pneg %p54
        $region34: #{tpu_custom_call.1} parent=31 // pred_check_branch
          %214 = sbr.rel (%p212) target = $region36
        $region35: #{tpu_custom_call.1} parent=31 // pred_region
          %215 = dma.done %s208, 4096
        $region36: #{tpu_custom_call.1} parent=31 // pred_fallthru
          _
        // Predicated region
        $region37: #{tpu_custom_call.1} parent=31 // pred_check
          %p216 = pneg %p80
        $region38: #{tpu_custom_call.1} parent=31 // pred_check_branch
          %218 = sbr.rel (%p216) target = $region40
        $region39: #{tpu_custom_call.1} parent=31 // pred_region
          %219 = dma.done [#allocation6], 64
        $region40: #{tpu_custom_call.1} parent=31 // pred_fallthru
          _
        // Predicated region
        $region41: #{tpu_custom_call.1} parent=31 // pred_check
          %p220 = pneg %p106
        $region42: #{tpu_custom_call.1} parent=31 // pred_check_branch
          %222 = sbr.rel (%p220) target = $region44
        $region43: #{tpu_custom_call.1} parent=31 // pred_region
          %223 = dma.done [#allocation6], 16
        $region44: #{tpu_custom_call.1} parent=31 // pred_fallthru
          _
        %s224 = sand.u32 %s41, 1
        %s225 = scalar_lea.sflag [#allocation3], %s224
        %s226 = sand.u32 %s41, 1
        %s227 = smul.addr %s226, 256
        %s228 = scalar_lea.vmem [#allocation2], %s227
        %p229 = pneg %p54
        %p230 = pneg %p51
        %p231 = pneg %p80
        %p232 = pneg %p77
        %p233 = pneg %p106
        %p234 = pneg %p103
        %p235 = pneg %p134
        %p236 = pneg %p131
        %s237 = sand.u32 %s121, 1
        %s238 = scalar_lea.sflag [#allocation4], %s237
        %s239 = sand.u32 %s121, 1
        %s240 = smul.addr %s239, 256
        %s241 = scalar_lea.vmem [#allocation8], %s240
        %s242 = smul.u32 32, %s26
        %s243 = smul.u32 32, %s26
        %v244 = vld [vmem:[%s211] sm:$0xff]
        %v245 = vld [vmem:[%s211 + $0x8] sm:$0xff]
        %v246 = vld [vmem:[%s211 + $0x10] sm:$0xff]
        %v247 = vld [vmem:[%s211 + $0x18] sm:$0xff]
        %v248 = vld [vmem:[%s211 + $0x20] sm:$0xff]
        %v249 = vld [vmem:[%s211 + $0x28] sm:$0xff]
        %v250 = vld [vmem:[%s211 + $0x30] sm:$0xff]
        %v251 = vld [vmem:[%s211 + $0x38] sm:$0xff]
        %v252 = vld [vmem:[%s211 + $0x40] sm:$0xff]
        %v253 = vld [vmem:[%s211 + $0x48] sm:$0xff]
        %v254 = vld [vmem:[%s211 + $0x50] sm:$0xff]
        %v255 = vld [vmem:[%s211 + $0x58] sm:$0xff]
        %v256 = vld [vmem:[%s211 + $0x60] sm:$0xff]
        %v257 = vld [vmem:[%s211 + $0x68] sm:$0xff]
        %v258 = vld [vmem:[%s211 + $0x70] sm:$0xff]
        %v259 = vld [vmem:[%s211 + $0x78] sm:$0xff]
        %v260 = vld [vmem:[%s211 + $0x80] sm:$0xff]
        %v261 = vld [vmem:[%s211 + $0x88] sm:$0xff]
        %v262 = vld [vmem:[%s211 + $0x90] sm:$0xff]
        %v263 = vld [vmem:[%s211 + $0x98] sm:$0xff]
        %v264 = vld [vmem:[%s211 + $0xa0] sm:$0xff]
        %v265 = vld [vmem:[%s211 + $0xa8] sm:$0xff]
        %v266 = vld [vmem:[%s211 + $0xb0] sm:$0xff]
        %v267 = vld [vmem:[%s211 + $0xb8] sm:$0xff]
        %v268 = vld [vmem:[%s211 + $0xc0] sm:$0xff]
        %v269 = vld [vmem:[%s211 + $0xc8] sm:$0xff]
        %v270 = vld [vmem:[%s211 + $0xd0] sm:$0xff]
        %v271 = vld [vmem:[%s211 + $0xd8] sm:$0xff]
        %v272 = vld [vmem:[%s211 + $0xe0] sm:$0xff]
        %v273 = vld [vmem:[%s211 + $0xe8] sm:$0xff]
        %v274 = vld [vmem:[%s211 + $0xf0] sm:$0xff]
        %v275 = vld [vmem:[%s211 + $0xf8] sm:$0xff]
        %v276 = vld [vmem:[#allocation5] sm:$0xf]
        %v277 = vld [vmem:[#allocation7] sm:$0x1]
        %v279 = vlaneseq
        %v280 = vshrl.u32 %v279, 7
        %v281 = vsub.s32 0, %v280
        %v282 = vrot.slane %v277, %v281
        %vm284 = vcmask 31744
        %v286 = vsel %vm284, %v244, 0
        %v289 = vsel %vm284, %v245, 0
        %v292 = vsel %vm284, %v246, 0
        %v295 = vsel %vm284, %v247, 0
        %v298 = vsel %vm284, %v248, 0
        %v301 = vsel %vm284, %v249, 0
        %v304 = vsel %vm284, %v250, 0
        %v307 = vsel %vm284, %v251, 0
        %v310 = vsel %vm284, %v252, 0
        %v313 = vsel %vm284, %v253, 0
        %v316 = vsel %vm284, %v254, 0
        %v319 = vsel %vm284, %v255, 0
        %v322 = vsel %vm284, %v256, 0
        %v325 = vsel %vm284, %v257, 0
        %v328 = vsel %vm284, %v258, 0
        %v331 = vsel %vm284, %v259, 0
        %v334 = vsel %vm284, %v260, 0
        %v337 = vsel %vm284, %v261, 0
        %v340 = vsel %vm284, %v262, 0
        %v343 = vsel %vm284, %v263, 0
        %v346 = vsel %vm284, %v264, 0
        %v349 = vsel %vm284, %v265, 0
        %v352 = vsel %vm284, %v266, 0
        %v355 = vsel %vm284, %v267, 0
        %v358 = vsel %vm284, %v268, 0
        %v361 = vsel %vm284, %v269, 0
        %v364 = vsel %vm284, %v270, 0
        %v367 = vsel %vm284, %v271, 0
        %v370 = vsel %vm284, %v272, 0
        %v373 = vsel %vm284, %v273, 0
        %v376 = vsel %vm284, %v274, 0
        %v379 = vsel %vm284, %v275, 0
        %vm381 = vcmask 1043456
        %v383 = vsel %vm381, %v276, 0
        %385 = vmatprep.subr.mxu0 0.0
        %386 = vmatpush1.msra.mxu0 %v383
        %387 = vmatprep.subr.mxu0 0.0
        %388 = vmatpush1.msra.mxu0 0.0
        %389 = vmatprep.subr.mxu0 0.0
        %390 = vmatpush1.msra.mxu0 0.0
        %391 = vmatprep.subr.mxu0 0.0
        %392 = vmatpush1.msra.mxu0 0.0
        %393 = vmatprep.subr.mxu0 0.0
        %394 = vmatpush1.msra.mxu0 0.0
        %395 = vmatprep.subr.mxu0 0.0
        %396 = vmatpush1.msra.mxu0 0.0
        %397 = vmatprep.subr.mxu0 0.0
        %398 = vmatpush1.msra.mxu0 0.0
        %399 = vmatprep.subr.mxu0 0.0
        %400 = vmatpush1.msra.mxu0 0.0
        %401 = vmatprep.subr.mxu0 0.0
        %402 = vmatpush1.msra.mxu0 0.0
        %403 = vmatprep.subr.mxu0 0.0
        %404 = vmatpush1.msra.mxu0 0.0
        %405 = vmatprep.subr.mxu0 0.0
        %406 = vmatpush1.msra.mxu0 0.0
        %407 = vmatprep.subr.mxu0 0.0
        %408 = vmatpush1.msra.mxu0 0.0
        %409 = vmatprep.subr.mxu0 0.0
        %410 = vmatpush1.msra.mxu0 0.0
        %411 = vmatprep.subr.mxu0 0.0
        %412 = vmatpush1.msra.mxu0 0.0
        %413 = vmatprep.subr.mxu0 0.0
        %414 = vmatpush1.msra.mxu0 0.0
        %415 = vmatprep.subr.mxu0 0.0
        %416 = vmatpush1.msra.mxu0 0.0
        %417 = vmatprep.subr.mxu0 0.0
        %418 = vmatpush1.msra.mxu0 0.0
        %419 = vmatprep.subr.mxu0 0.0
        %420 = vmatpush1.msra.mxu0 0.0
        %421 = vmatprep.subr.mxu0 0.0
        %422 = vmatpush1.msra.mxu0 0.0
        %423 = vmatprep.subr.mxu0 0.0
        %424 = vmatpush1.msra.mxu0 0.0
        %425 = vmatprep.subr.mxu0 0.0
        %426 = vmatpush1.msra.mxu0 0.0
        %427 = vmatprep.subr.mxu0 0.0
        %428 = vmatpush1.msra.mxu0 0.0
        %429 = vmatprep.subr.mxu0 0.0
        %430 = vmatpush1.msra.mxu0 0.0
        %431 = vmatprep.subr.mxu0 0.0
        %432 = vmatpush1.msra.mxu0 0.0
        %433 = vmatprep.subr.mxu0 0.0
        %434 = vmatpush1.msra.mxu0 0.0
        %435 = vmatprep.subr.mxu0 0.0
        %436 = vmatpush1.msra.mxu0 0.0
        %437 = vmatprep.subr.mxu0 0.0
        %438 = vmatpush1.msra.mxu0 0.0
        %439 = vmatprep.subr.mxu0 0.0
        %440 = vmatpush1.msra.mxu0 0.0
        %441 = vmatprep.subr.mxu0 0.0
        %442 = vmatpush1.msra.mxu0 0.0
        %443 = vmatprep.subr.mxu0 0.0
        %444 = vmatpush1.msra.mxu0 0.0
        %445 = vmatprep.subr.mxu0 0.0
        %446 = vmatpush1.msra.mxu0 0.0
        %447 = vmatprep.subr.mxu0 0.0
        %448 = vmatpush1.msra.mxu0 0.0
        %449 = vmatprep.mubr.f32.mxu0 0.0
        %450 = vmatmul.mubr.f32.gmra.mrb[0].mxu0 %v286
        %v451 = vpop.f32.mrb[0].mxu0
        %v452 = vadd.f32 %v282, %v451
        %v453 = vpop.f32.mrb[0].mxu0
        %454 = vmatprep.mubr.f32.mxu0 0.0
        %455 = vmatmul.mubr.f32.gmra.mrb[0].mxu0 %v289
        %v456 = vpop.f32.mrb[0].mxu0
        %v457 = vadd.f32 %v282, %v456
        %v458 = vpop.f32.mrb[0].mxu0
        %459 = vmatprep.mubr.f32.mxu0 0.0
        %460 = vmatmul.mubr.f32.gmra.mrb[0].mxu0 %v292
        %v461 = vpop.f32.mrb[0].mxu0
        %v462 = vadd.f32 %v282, %v461
        %v463 = vpop.f32.mrb[0].mxu0
        %464 = vmatprep.mubr.f32.mxu0 0.0
        %465 = vmatmul.mubr.f32.gmra.mrb[0].mxu0 %v295
        %v466 = vpop.f32.mrb[0].mxu0
        %v467 = vadd.f32 %v282, %v466
        %v468 = vpop.f32.mrb[0].mxu0
        %469 = vmatprep.mubr.f32.mxu0 0.0
        %470 = vmatmul.mubr.f32.gmra.mrb[0].mxu0 %v298
        %v471 = vpop.f32.mrb[0].mxu0
        %v472 = vadd.f32 %v282, %v471
        %v473 = vpop.f32.mrb[0].mxu0
        %474 = vmatprep.mubr.f32.mxu0 0.0
        %475 = vmatmul.mubr.f32.gmra.mrb[0].mxu0 %v301
        %v476 = vpop.f32.mrb[0].mxu0
        %v477 = vadd.f32 %v282, %v476
        %v478 = vpop.f32.mrb[0].mxu0
        %479 = vmatprep.mubr.f32.mxu0 0.0
        %480 = vmatmul.mubr.f32.gmra.mrb[0].mxu0 %v304
        %v481 = vpop.f32.mrb[0].mxu0
        %v482 = vadd.f32 %v282, %v481
        %v483 = vpop.f32.mrb[0].mxu0
        %484 = vmatprep.mubr.f32.mxu0 0.0
        %485 = vmatmul.mubr.f32.gmra.mrb[0].mxu0 %v307
        %v486 = vpop.f32.mrb[0].mxu0
        %v487 = vadd.f32 %v282, %v486
        %v488 = vpop.f32.mrb[0].mxu0
        %489 = vmatprep.mubr.f32.mxu0 0.0
        %490 = vmatmul.mubr.f32.gmra.mrb[0].mxu0 %v310
        %v491 = vpop.f32.mrb[0].mxu0
        %v492 = vadd.f32 %v282, %v491
        %v493 = vpop.f32.mrb[0].mxu0
        %494 = vmatprep.mubr.f32.mxu0 0.0
        %495 = vmatmul.mubr.f32.gmra.mrb[0].mxu0 %v313
        %v496 = vpop.f32.mrb[0].mxu0
        %v497 = vadd.f32 %v282, %v496
        %v498 = vpop.f32.mrb[0].mxu0
        %499 = vmatprep.mubr.f32.mxu0 0.0
        %500 = vmatmul.mubr.f32.gmra.mrb[0].mxu0 %v316
        %v501 = vpop.f32.mrb[0].mxu0
        %v502 = vadd.f32 %v282, %v501
        %v503 = vpop.f32.mrb[0].mxu0
        %504 = vmatprep.mubr.f32.mxu0 0.0
        %505 = vmatmul.mubr.f32.gmra.mrb[0].mxu0 %v319
        %v506 = vpop.f32.mrb[0].mxu0
        %v507 = vadd.f32 %v282, %v506
        %v508 = vpop.f32.mrb[0].mxu0
        %509 = vmatprep.mubr.f32.mxu0 0.0
        %510 = vmatmul.mubr.f32.gmra.mrb[0].mxu0 %v322
        %v511 = vpop.f32.mrb[0].mxu0
        %v512 = vadd.f32 %v282, %v511
        %v513 = vpop.f32.mrb[0].mxu0
        %514 = vmatprep.mubr.f32.mxu0 0.0
        %515 = vmatmul.mubr.f32.gmra.mrb[0].mxu0 %v325
        %v516 = vpop.f32.mrb[0].mxu0
        %v517 = vadd.f32 %v282, %v516
        %v518 = vpop.f32.mrb[0].mxu0
        %519 = vmatprep.mubr.f32.mxu0 0.0
        %520 = vmatmul.mubr.f32.gmra.mrb[0].mxu0 %v328
        %v521 = vpop.f32.mrb[0].mxu0
        %v522 = vadd.f32 %v282, %v521
        %v523 = vpop.f32.mrb[0].mxu0
        %524 = vmatprep.mubr.f32.mxu0 0.0
        %525 = vmatmul.mubr.f32.gmra.mrb[0].mxu0 %v331
        %v526 = vpop.f32.mrb[0].mxu0
        %v527 = vadd.f32 %v282, %v526
        %v528 = vpop.f32.mrb[0].mxu0
        %529 = vmatprep.mubr.f32.mxu0 0.0
        %530 = vmatmul.mubr.f32.gmra.mrb[0].mxu0 %v334
        %v531 = vpop.f32.mrb[0].mxu0
        %v532 = vadd.f32 %v282, %v531
        %v533 = vpop.f32.mrb[0].mxu0
        %534 = vmatprep.mubr.f32.mxu0 0.0
        %535 = vmatmul.mubr.f32.gmra.mrb[0].mxu0 %v337
        %v536 = vpop.f32.mrb[0].mxu0
        %v537 = vadd.f32 %v282, %v536
        %v538 = vpop.f32.mrb[0].mxu0
        %539 = vmatprep.mubr.f32.mxu0 0.0
        %540 = vmatmul.mubr.f32.gmra.mrb[0].mxu0 %v340
        %v541 = vpop.f32.mrb[0].mxu0
        %v542 = vadd.f32 %v282, %v541
        %v543 = vpop.f32.mrb[0].mxu0
        %544 = vmatprep.mubr.f32.mxu0 0.0
        %545 = vmatmul.mubr.f32.gmra.mrb[0].mxu0 %v343
        %v546 = vpop.f32.mrb[0].mxu0
        %v547 = vadd.f32 %v282, %v546
        %v548 = vpop.f32.mrb[0].mxu0
        %549 = vmatprep.mubr.f32.mxu0 0.0
        %550 = vmatmul.mubr.f32.gmra.mrb[0].mxu0 %v346
        %v551 = vpop.f32.mrb[0].mxu0
        %v552 = vadd.f32 %v282, %v551
        %v553 = vpop.f32.mrb[0].mxu0
        %554 = vmatprep.mubr.f32.mxu0 0.0
        %555 = vmatmul.mubr.f32.gmra.mrb[0].mxu0 %v349
        %v556 = vpop.f32.mrb[0].mxu0
        %v557 = vadd.f32 %v282, %v556
        %v558 = vpop.f32.mrb[0].mxu0
        %559 = vmatprep.mubr.f32.mxu0 0.0
        %560 = vmatmul.mubr.f32.gmra.mrb[0].mxu0 %v352
        %v561 = vpop.f32.mrb[0].mxu0
        %v562 = vadd.f32 %v282, %v561
        %v563 = vpop.f32.mrb[0].mxu0
        %564 = vmatprep.mubr.f32.mxu0 0.0
        %565 = vmatmul.mubr.f32.gmra.mrb[0].mxu0 %v355
        %v566 = vpop.f32.mrb[0].mxu0
        %v567 = vadd.f32 %v282, %v566
        %v568 = vpop.f32.mrb[0].mxu0
        %569 = vmatprep.mubr.f32.mxu0 0.0
        %570 = vmatmul.mubr.f32.gmra.mrb[0].mxu0 %v358
        %v571 = vpop.f32.mrb[0].mxu0
        %v572 = vadd.f32 %v282, %v571
        %v573 = vpop.f32.mrb[0].mxu0
        %574 = vmatprep.mubr.f32.mxu0 0.0
        %575 = vmatmul.mubr.f32.gmra.mrb[0].mxu0 %v361
        %v576 = vpop.f32.mrb[0].mxu0
        %v577 = vadd.f32 %v282, %v576
        %v578 = vpop.f32.mrb[0].mxu0
        %579 = vmatprep.mubr.f32.mxu0 0.0
        %580 = vmatmul.mubr.f32.gmra.mrb[0].mxu0 %v364
        %v581 = vpop.f32.mrb[0].mxu0
        %v582 = vadd.f32 %v282, %v581
        %v583 = vpop.f32.mrb[0].mxu0
        %584 = vmatprep.mubr.f32.mxu0 0.0
        %585 = vmatmul.mubr.f32.gmra.mrb[0].mxu0 %v367
        %v586 = vpop.f32.mrb[0].mxu0
        %v587 = vadd.f32 %v282, %v586
        %v588 = vpop.f32.mrb[0].mxu0
        %589 = vmatprep.mubr.f32.mxu0 0.0
        %590 = vmatmul.mubr.f32.gmra.mrb[0].mxu0 %v370
        %v591 = vpop.f32.mrb[0].mxu0
        %v592 = vadd.f32 %v282, %v591
        %v593 = vpop.f32.mrb[0].mxu0
        %594 = vmatprep.mubr.f32.mxu0 0.0
        %595 = vmatmul.mubr.f32.gmra.mrb[0].mxu0 %v373
        %v596 = vpop.f32.mrb[0].mxu0
        %v597 = vadd.f32 %v282, %v596
        %v598 = vpop.f32.mrb[0].mxu0
        %599 = vmatprep.mubr.f32.mxu0 0.0
        %600 = vmatmul.mubr.f32.gmra.mrb[0].mxu0 %v376
        %v601 = vpop.f32.mrb[0].mxu0
        %v602 = vadd.f32 %v282, %v601
        %v603 = vpop.f32.mrb[0].mxu0
        %604 = vmatprep.mubr.f32.mxu0 0.0
        %605 = vmatmul.mubr.f32.gmra.mrb[0].mxu0 %v379
        %v606 = vpop.f32.mrb[0].mxu0
        %v607 = vadd.f32 %v282, %v606
        %v608 = vpop.f32.mrb[0].mxu0
        %609 = vdwg.mxu0
        %v610 = vmax.f32 %v452, 0.0
        %v611 = vmax.f32 %v457, 0.0
        %v612 = vmax.f32 %v462, 0.0
        %v613 = vmax.f32 %v467, 0.0
        %v614 = vmax.f32 %v472, 0.0
        %v615 = vmax.f32 %v477, 0.0
        %v616 = vmax.f32 %v482, 0.0
        %v617 = vmax.f32 %v487, 0.0
        %v618 = vmax.f32 %v492, 0.0
        %v619 = vmax.f32 %v497, 0.0
        %v620 = vmax.f32 %v502, 0.0
        %v621 = vmax.f32 %v507, 0.0
        %v622 = vmax.f32 %v512, 0.0
        %v623 = vmax.f32 %v517, 0.0
        %v624 = vmax.f32 %v522, 0.0
        %v625 = vmax.f32 %v527, 0.0
        %v626 = vmax.f32 %v532, 0.0
        %v627 = vmax.f32 %v537, 0.0
        %v628 = vmax.f32 %v542, 0.0
        %v629 = vmax.f32 %v547, 0.0
        %v630 = vmax.f32 %v552, 0.0
        %v631 = vmax.f32 %v557, 0.0
        %v632 = vmax.f32 %v562, 0.0
        %v633 = vmax.f32 %v567, 0.0
        %v634 = vmax.f32 %v572, 0.0
        %v635 = vmax.f32 %v577, 0.0
        %v636 = vmax.f32 %v582, 0.0
        %v637 = vmax.f32 %v587, 0.0
        %v638 = vmax.f32 %v592, 0.0
        %v639 = vmax.f32 %v597, 0.0
        %v640 = vmax.f32 %v602, 0.0
        %v641 = vmax.f32 %v607, 0.0
        %642 = vst.msk [vmem:[%s241] sm:$0xff] %vm284, %v610
        %643 = vst.msk [vmem:[%s241 + $0x8] sm:$0xff] %vm284, %v611
        %644 = vst.msk [vmem:[%s241 + $0x10] sm:$0xff] %vm284, %v612
        %645 = vst.msk [vmem:[%s241 + $0x18] sm:$0xff] %vm284, %v613
        %646 = vst.msk [vmem:[%s241 + $0x20] sm:$0xff] %vm284, %v614
        %647 = vst.msk [vmem:[%s241 + $0x28] sm:$0xff] %vm284, %v615
        %648 = vst.msk [vmem:[%s241 + $0x30] sm:$0xff] %vm284, %v616
        %649 = vst.msk [vmem:[%s241 + $0x38] sm:$0xff] %vm284, %v617
        %650 = vst.msk [vmem:[%s241 + $0x40] sm:$0xff] %vm284, %v618
        %651 = vst.msk [vmem:[%s241 + $0x48] sm:$0xff] %vm284, %v619
        %652 = vst.msk [vmem:[%s241 + $0x50] sm:$0xff] %vm284, %v620
        %653 = vst.msk [vmem:[%s241 + $0x58] sm:$0xff] %vm284, %v621
        %654 = vst.msk [vmem:[%s241 + $0x60] sm:$0xff] %vm284, %v622
        %655 = vst.msk [vmem:[%s241 + $0x68] sm:$0xff] %vm284, %v623
        %656 = vst.msk [vmem:[%s241 + $0x70] sm:$0xff] %vm284, %v624
        %657 = vst.msk [vmem:[%s241 + $0x78] sm:$0xff] %vm284, %v625
        %658 = vst.msk [vmem:[%s241 + $0x80] sm:$0xff] %vm284, %v626
        %659 = vst.msk [vmem:[%s241 + $0x88] sm:$0xff] %vm284, %v627
        %660 = vst.msk [vmem:[%s241 + $0x90] sm:$0xff] %vm284, %v628
        %661 = vst.msk [vmem:[%s241 + $0x98] sm:$0xff] %vm284, %v629
        %662 = vst.msk [vmem:[%s241 + $0xa0] sm:$0xff] %vm284, %v630
        %663 = vst.msk [vmem:[%s241 + $0xa8] sm:$0xff] %vm284, %v631
        %664 = vst.msk [vmem:[%s241 + $0xb0] sm:$0xff] %vm284, %v632
        %665 = vst.msk [vmem:[%s241 + $0xb8] sm:$0xff] %vm284, %v633
        %666 = vst.msk [vmem:[%s241 + $0xc0] sm:$0xff] %vm284, %v634
        %667 = vst.msk [vmem:[%s241 + $0xc8] sm:$0xff] %vm284, %v635
        %668 = vst.msk [vmem:[%s241 + $0xd0] sm:$0xff] %vm284, %v636
        %669 = vst.msk [vmem:[%s241 + $0xd8] sm:$0xff] %vm284, %v637
        %670 = vst.msk [vmem:[%s241 + $0xe0] sm:$0xff] %vm284, %v638
        %671 = vst.msk [vmem:[%s241 + $0xe8] sm:$0xff] %vm284, %v639
        %672 = vst.msk [vmem:[%s241 + $0xf0] sm:$0xff] %vm284, %v640
        %673 = vst.msk [vmem:[%s241 + $0xf8] sm:$0xff] %vm284, %v641
        %s674 = sand.u32 %s121, 1
        %s675 = scalar_lea.sflag [#allocation4], %s674
        %s676 = sand.u32 %s121, 1
        %s677 = smul.addr %s676, 256
        %s678 = scalar_lea.vmem [#allocation8], %s677
        // Predicated region
        $region45: #{tpu_custom_call.1} parent=31 // pred_check
          %p679 = pneg %p131
        $region46: #{tpu_custom_call.1} parent=31 // pred_check_branch
          %681 = sbr.rel (%p679) target = $region48
        $region47: #{tpu_custom_call.1} parent=31 // pred_region
          %s682 = smul.u32 32, %s26
          %s684 = ssub.s32 4096, 4096
          %685 = vsyncadd %s675, %s684
          %s686 = sadd.s32 %s25, %s682
          %s687 = smul.addr %s686, 128
          %s688 = scalar_lea.hbm %s3, %s687
          %s689 = sshll.u32 %s678, 4
          %s690 = int_to_ptr.vmem [resolvable:$true] %s689
          %695 = dma.vmem_to_hbm [thread:$0]  %s690, 4096, %s688, %s675, 128, 128, 8
        $region48: #{tpu_custom_call.1} parent=31 // pred_fallthru
          _
      $region32: #{tpu_custom_call.1} parent=5 // pred_fallthru
        _
      %p696 = scmp.le.s32.totalorder 2, %s16
      // Predicated region
      $region49: #{tpu_custom_call.1} parent=5 // pred_check
        %p697 = pneg %p696
      $region50: #{tpu_custom_call.1} parent=5 // pred_check_branch
        %699 = sbr.rel (%p697) target = $region52
      $region51: #{tpu_custom_call.1} parent=5 // pred_region
        %s700 = ssub.s32 %s16, 2
        // Predicated region
        $region53: #{tpu_custom_call.1} parent=51 // pred_check
          %p701 = pneg %p137
        $region54: #{tpu_custom_call.1} parent=51 // pred_check_branch
          %703 = sbr.rel (%p701) target = $region56
        $region55: #{tpu_custom_call.1} parent=51 // pred_region
          %s704 = sand.u32 %s122, 1
          %s705 = scalar_lea.sflag [#allocation4], %s704
          %s706 = sand.u32 %s122, 1
          %s707 = smul.addr %s706, 256
          %s708 = scalar_lea.vmem [#allocation8], %s707
          %709 = dma.done %s705, 4096
        $region56: #{tpu_custom_call.1} parent=51 // pred_fallthru
          _
      $region52: #{tpu_custom_call.1} parent=5 // pred_fallthru
        _
    $region6: #{tpu_custom_call.1} parent=1 // loop_footer
      %s20 = sadd.s32 1, %s16
    $region7: #{tpu_custom_call.1} parent=1 // loop_footer_branch
      %15 = sbr.rel target = $region3
    $region8: #{tpu_custom_call.1} parent=1 // loop_exit
      _
    %710 = vsyncpa [#allocation3], 1
    %s711 = scalar_lea.sflag [#allocation3], 1
    %712 = vsyncpa %s711, 1
    %713 = vsyncpa [#allocation6], 1
    %714 = vsyncpa [#allocation4], 1
    %s715 = scalar_lea.sflag [#allocation4], 1
    %716 = vsyncpa %s715, 1

// kernel: tpu_custom_call.1
$region0: #{tpu_custom_call.1}
  #allocation0 [shape = 'u32[]', space=smem, size = 0x4, offset = 0x4, fixed_abs, tag = 'smem constant byte address 0x4 - core index']
  #allocation1 [shape = 'u32[144,128]{1,0:T(1,128)}', space=vmem, size = 0x12000, scoped, tag = 'internal scratch']
  %s0 = inlined_call_operand.hbm [shape: f32[512,4], index: 0, kind: input, shape index: {}]
  %s1 = inlined_call_operand.hbm [shape: f32[4,4], index: 1, kind: input, shape index: {}]
  %s2 = inlined_call_operand.hbm [shape: f32[1,4], index: 2, kind: input, shape index: {}]
  %s3 = inlined_call_operand.hbm [shape: f32[512,4], index: 3, kind: output, shape index: {}]
  %s4 = sld [smem:[#allocation0]]
  $region57: #{tpu_custom_call.1} parent=0
    _
  %s6 = ssub.s32 1, %s4
  %s7 = scalar_select 0, %s6, %s4
  $region1: #{tpu_custom_call.1} parent=0
    #allocation2 [shape = 'u8[262144]{0}', space=vmem, size = 0x40000, scoped, tag = 'input window, operand 0']
    #allocation3 [shape = 's32[2]{0}', space=sflag, size = 0x8, scoped, tag = 'scoped memory for tpu_custom_call.1']
    #allocation4 [shape = 's32[2]{0}', space=sflag, size = 0x8, scoped, tag = 'scoped memory for tpu_custom_call.1']
    #allocation5 [shape = 'u8[2048]{0}', space=vmem, size = 0x800, scoped, tag = 'input window, operand 1, single buffered']
    #allocation6 [shape = 's32[1]{0}', space=sflag, size = 0x4, scoped, tag = 'scoped memory for tpu_custom_call.1']
    #allocation7 [shape = 'u8[512]{0}', space=vmem, size = 0x400, scoped, tag = 'input window, operand 2, single buffered']
    #allocation8 [shape = 'u8[262144]{0}', space=vmem, size = 0x40000, scoped, tag = 'output window, operand 0']
    %8 = vsyncpa [#allocation3], 0
    %s9 = scalar_lea.sflag [#allocation3], 1
    %10 = vsyncpa %s9, 0
    %11 = vsyncpa [#allocation6], 0
    %12 = vsyncpa [#allocation4], 0
    %s13 = scalar_lea.sflag [#allocation4], 1
    %14 = vsyncpa %s13, 0
    loop: start=0, step=1, limit=4
    $region2: #{tpu_custom_call.1} parent=1 // loop_pre_header
      _
    $region3: #{tpu_custom_call.1} parent=1 // loop_header
      %s16 = sphi 0, %s20
      %p17 = scmp.ge.s32.totalorder %s16, 4
      %s23 = sphi 0, %s35
      %s24 = sphi 0, %s31
      %s25 = sphi 0, %s23
      %s26 = sphi 0, %s24
      %s27 = sphi 0, %s25
      %s28 = sphi 0, %s26
      %s38 = sphi 0, %s40
      %s41 = sphi 0, %s38
      %s42 = sphi 0, %s41
      %s58 = sphi 0, %s42
      %s64 = sphi 0, %s66
      %s67 = sphi 0, %s64
      %s68 = sphi 0, %s67
      %s84 = sphi 0, %s68
      %s90 = sphi 0, %s92
      %s93 = sphi 0, %s90
      %s94 = sphi 0, %s93
      %s110 = sphi 0, %s94
      %s118 = sphi 0, %s120
      %s121 = sphi 0, %s118
      %s122 = sphi 0, %s121
      %s138 = sphi 0, %s122
    $region4: #{tpu_custom_call.1} parent=1 // loop_header_branch
      %19 = sbr.rel (%p17) target = $region8
    $region5: #{tpu_custom_call.1} parent=1 // loop_body
      %s21 = ssub.s32 %s16, 1
      %s22 = ssub.s32 %s16, 2
      %s29 = sadd.s32 1, %s24
      %p30 = scmp.ge.s32.totalorder %s29, 2
      %s31 = scalar_select %p30, 0, %s29
      %s32 = sadd.s32 1, %s23
      %s33 = scalar_select %p30, %s32, %s23
      %p34 = scmp.ge.s32.totalorder %s33, 1
      %s35 = scalar_select %p34, 0, %s33
      %s36 = ssub.s32 %s24, %s31
      %p37 = scmp.eq.s32.totalorder %s36, 0
      %s39 = sadd.s32 %s38, 1
      %s40 = scalar_select %p37, %s38, %s39
      %p43 = pneg %p37
      %p44 = scmp.eq.s32.totalorder %s16, 1
      %p45 = por %p43, %p44
      %p46 = scmp.ne.s32.totalorder %s38, %s41
      %p47 = scmp.eq.s32.totalorder %s16, 0
      %p48 = por %p46, %p47
      %p49 = scmp.ne.s32.totalorder %s38, %s41
      %p50 = scmp.eq.s32.totalorder %s21, 1
      %p51 = por %p49, %p50
      %p52 = scmp.ne.s32.totalorder %s41, %s42
      %p53 = scmp.eq.s32.totalorder %s21, 0
      %p54 = por %p52, %p53
      %p55 = scmp.ne.s32.totalorder %s41, %s42
      %p56 = scmp.eq.s32.totalorder %s22, 1
      %p57 = por %p55, %p56
      %p59 = scmp.ne.s32.totalorder %s42, %s58
      %p60 = scmp.eq.s32.totalorder %s22, 0
      %p61 = por %p59, %p60
      %s62 = ssub.s32 %s23, %s35
      %p63 = scmp.eq.s32.totalorder %s62, 0
      %s65 = sadd.s32 %s64, 1
      %s66 = scalar_select %p63, %s64, %s65
      %p69 = pneg %p63
      %p70 = scmp.eq.s32.totalorder %s16, 1
      %p71 = por %p69, %p70
      %p72 = scmp.ne.s32.totalorder %s64, %s67
      %p73 = scmp.eq.s32.totalorder %s16, 0
      %p74 = por %p72, %p73
      %p75 = scmp.ne.s32.totalorder %s64, %s67
      %p76 = scmp.eq.s32.totalorder %s21, 1
      %p77 = por %p75, %p76
      %p78 = scmp.ne.s32.totalorder %s67, %s68
      %p79 = scmp.eq.s32.totalorder %s21, 0
      %p80 = por %p78, %p79
      %p81 = scmp.ne.s32.totalorder %s67, %s68
      %p82 = scmp.eq.s32.totalorder %s22, 1
      %p83 = por %p81, %p82
      %p85 = scmp.ne.s32.totalorder %s68, %s84
      %p86 = scmp.eq.s32.totalorder %s22, 0
      %p87 = por %p85, %p86
      %s88 = ssub.s32 %s23, %s35
      %p89 = scmp.eq.s32.totalorder %s88, 0
      %s91 = sadd.s32 %s90, 1
      %s92 = scalar_select %p89, %s90, %s91
      %p95 = pneg %p89
      %p96 = scmp.eq.s32.totalorder %s16, 1
      %p97 = por %p95, %p96
      %p98 = scmp.ne.s32.totalorder %s90, %s93
      %p99 = scmp.eq.s32.totalorder %s16, 0
      %p100 = por %p98, %p99
      %p101 = scmp.ne.s32.totalorder %s90, %s93
      %p102 = scmp.eq.s32.totalorder %s21, 1
      %p103 = por %p101, %p102
      %p104 = scmp.ne.s32.totalorder %s93, %s94
      %p105 = scmp.eq.s32.totalorder %s21, 0
      %p106 = por %p104, %p105
      %p107 = scmp.ne.s32.totalorder %s93, %s94
      %p108 = scmp.eq.s32.totalorder %s22, 1
      %p109 = por %p107, %p108
      %p111 = scmp.ne.s32.totalorder %s94, %s110
      %p112 = scmp.eq.s32.totalorder %s22, 0
      %p113 = por %p111, %p112
      %s114 = ssub.s32 %s24, %s31
      %s115 = ssub.s32 %s23, %s35
      %s116 = sor.u32 %s114, %s115
      %p117 = scmp.eq.s32.totalorder %s116, 0
      %s119 = sadd.s32 %s118, 1
      %s120 = scalar_select %p117, %s118, %s119
      %p123 = pneg %p117
      %p124 = scmp.eq.s32.totalorder %s16, 1
      %p125 = por %p123, %p124
      %p126 = scmp.ne.s32.totalorder %s118, %s121
      %p127 = scmp.eq.s32.totalorder %s16, 0
      %p128 = por %p126, %p127
      %p129 = scmp.ne.s32.totalorder %s118, %s121
      %p130 = scmp.eq.s32.totalorder %s21, 1
      %p131 = por %p129, %p130
      %p132 = scmp.ne.s32.totalorder %s121, %s122
      %p133 = scmp.eq.s32.totalorder %s21, 0
      %p134 = por %p132, %p133
      %p135 = scmp.ne.s32.totalorder %s121, %s122
      %p136 = scmp.eq.s32.totalorder %s22, 1
      %p137 = por %p135, %p136
      %p139 = scmp.ne.s32.totalorder %s122, %s138
      %p140 = scmp.eq.s32.totalorder %s22, 0
      %p141 = por %p139, %p140
      %p142 = scmp.le.s32.totalorder 1, %s16
      %p143 = scmp.lt.s32.totalorder %s16, 3
      %p144 = pnand %p142, %p143
      %p145 = pneg %p144
      // Predicated region
      $region9: #{tpu_custom_call.1} parent=5 // pred_check
        _
      $region10: #{tpu_custom_call.1} parent=5 // pred_check_branch
        %147 = sbr.rel (%p144) target = $region12
      $region11: #{tpu_custom_call.1} parent=5 // pred_region
        %s148 = ssub.s32 %s16, 1
        // Predicated region
        $region13: #{tpu_custom_call.1} parent=11 // pred_check
          %p149 = pneg %p80
        $region14: #{tpu_custom_call.1} parent=11 // pred_check_branch
          %151 = sbr.rel (%p149) target = $region16
        $region15: #{tpu_custom_call.1} parent=11 // pred_region
          %s153 = ssub.s32 64, 64
          %154 = vsyncadd [#allocation6], %s153
          %s155 = smul.addr %s25, 64
          %s156 = scalar_lea.hbm %s1, %s155
          %s158 = sshll.u32 [#allocation5], 4
          %s159 = int_to_ptr.vmem [resolvable:$true] %s158
          %161 = dma.hbm_to_vmem [thread:$0]  %s156, 64, %s159, [#allocation6]
        $region16: #{tpu_custom_call.1} parent=11 // pred_fallthru
          _
        // Predicated region
        $region17: #{tpu_custom_call.1} parent=11 // pred_check
          %p162 = pneg %p106
        $region18: #{tpu_custom_call.1} parent=11 // pred_check_branch
          %164 = sbr.rel (%p162) target = $region20
        $region19: #{tpu_custom_call.1} parent=11 // pred_region
          %s166 = ssub.s32 16, 16
          %167 = vsyncadd [#allocation6], %s166
          %s168 = smul.addr %s25, 16
          %s169 = scalar_lea.hbm %s2, %s168
          %s171 = sshll.u32 [#allocation7], 4
          %s172 = int_to_ptr.vmem [resolvable:$true] %s171
          %174 = dma.hbm_to_vmem [thread:$0]  %s169, 16, %s172, [#allocation6]
        $region20: #{tpu_custom_call.1} parent=11 // pred_fallthru
          _
      $region12: #{tpu_custom_call.1} parent=5 // pred_fallthru
        _
      %p175 = scmp.lt.s32.totalorder %s16, 2
      // Predicated region
      $region21: #{tpu_custom_call.1} parent=5 // pred_check
        %p176 = pneg %p175
      $region22: #{tpu_custom_call.1} parent=5 // pred_check_branch
        %178 = sbr.rel (%p176) target = $region24
      $region23: #{tpu_custom_call.1} parent=5 // pred_region
        // Predicated region
        $region25: #{tpu_custom_call.1} parent=23 // pred_check
          %p179 = pneg %p48
        $region26: #{tpu_custom_call.1} parent=23 // pred_check_branch
          %181 = sbr.rel (%p179) target = $region28
        $region27: #{tpu_custom_call.1} parent=23 // pred_region
          %s182 = sand.u32 %s38, 1
          %s183 = scalar_lea.sflag [#allocation3], %s182
          %s184 = sand.u32 %s38, 1
          %s185 = smul.addr %s184, 256
          %s186 = scalar_lea.vmem [#allocation2], %s185
          %s187 = smul.u32 32, %s24
          %s189 = ssub.s32 4096, 4096
          %190 = vsyncadd %s183, %s189
          %s191 = smul.addr %s187, 128
          %s192 = scalar_lea.hbm %s0, %s191
          %s193 = sshll.u32 %s186, 4
          %s194 = int_to_ptr.vmem [resolvable:$true] %s193
          %199 = dma.hbm_to_vmem [thread:$0]  %s192, 4096, %s194, %s183, 128, 128, 8
        $region28: #{tpu_custom_call.1} parent=23 // pred_fallthru
          _
      $region24: #{tpu_custom_call.1} parent=5 // pred_fallthru
        _
      %p200 = scmp.le.s32.totalorder 1, %s16
      %p201 = scmp.lt.s32.totalorder %s16, 3
      %p202 = pnand %p200, %p201
      %p203 = pneg %p202
      // Predicated region
      $region29: #{tpu_custom_call.1} parent=5 // pred_check
        _
      $region30: #{tpu_custom_call.1} parent=5 // pred_check_branch
        %205 = sbr.rel (%p202) target = $region32
      $region31: #{tpu_custom_call.1} parent=5 // pred_region
        %s206 = ssub.s32 %s16, 1
        %s207 = sand.u32 %s41, 1
        %s208 = scalar_lea.sflag [#allocation3], %s207
        %s209 = sand.u32 %s41, 1
        %s210 = smul.addr %s209, 256
        %s211 = scalar_lea.vmem [#allocation2], %s210
        // Predicated region
        $region33: #{tpu_custom_call.1} parent=31 // pred_check
          %p212 = pneg %p54
        $region34: #{tpu_custom_call.1} parent=31 // pred_check_branch
          %214 = sbr.rel (%p212) target = $region36
        $region35: #{tpu_custom_call.1} parent=31 // pred_region
          %215 = dma.done %s208, 4096
        $region36: #{tpu_custom_call.1} parent=31 // pred_fallthru
          _
        // Predicated region
        $region37: #{tpu_custom_call.1} parent=31 // pred_check
          %p216 = pneg %p80
        $region38: #{tpu_custom_call.1} parent=31 // pred_check_branch
          %218 = sbr.rel (%p216) target = $region40
        $region39: #{tpu_custom_call.1} parent=31 // pred_region
          %219 = dma.done [#allocation6], 64
        $region40: #{tpu_custom_call.1} parent=31 // pred_fallthru
          _
        // Predicated region
        $region41: #{tpu_custom_call.1} parent=31 // pred_check
          %p220 = pneg %p106
        $region42: #{tpu_custom_call.1} parent=31 // pred_check_branch
          %222 = sbr.rel (%p220) target = $region44
        $region43: #{tpu_custom_call.1} parent=31 // pred_region
          %223 = dma.done [#allocation6], 16
        $region44: #{tpu_custom_call.1} parent=31 // pred_fallthru
          _
        %s224 = sand.u32 %s41, 1
        %s225 = scalar_lea.sflag [#allocation3], %s224
        %s226 = sand.u32 %s41, 1
        %s227 = smul.addr %s226, 256
        %s228 = scalar_lea.vmem [#allocation2], %s227
        %p229 = pneg %p54
        %p230 = pneg %p51
        %p231 = pneg %p80
        %p232 = pneg %p77
        %p233 = pneg %p106
        %p234 = pneg %p103
        %p235 = pneg %p134
        %p236 = pneg %p131
        %s237 = sand.u32 %s121, 1
        %s238 = scalar_lea.sflag [#allocation4], %s237
        %s239 = sand.u32 %s121, 1
        %s240 = smul.addr %s239, 256
        %s241 = scalar_lea.vmem [#allocation8], %s240
        %s242 = smul.u32 32, %s26
        %s243 = smul.u32 32, %s26
        %v244 = vld [vmem:[%s211] sm:$0xff]
        %v245 = vld [vmem:[%s211 + $0x8] sm:$0xff]
        %v246 = vld [vmem:[%s211 + $0x10] sm:$0xff]
        %v247 = vld [vmem:[%s211 + $0x18] sm:$0xff]
        %v248 = vld [vmem:[%s211 + $0x20] sm:$0xff]
        %v249 = vld [vmem:[%s211 + $0x28] sm:$0xff]
        %v250 = vld [vmem:[%s211 + $0x30] sm:$0xff]
        %v251 = vld [vmem:[%s211 + $0x38] sm:$0xff]
        %v252 = vld [vmem:[%s211 + $0x40] sm:$0xff]
        %v253 = vld [vmem:[%s211 + $0x48] sm:$0xff]
        %v254 = vld [vmem:[%s211 + $0x50] sm:$0xff]
        %v255 = vld [vmem:[%s211 + $0x58] sm:$0xff]
        %v256 = vld [vmem:[%s211 + $0x60] sm:$0xff]
        %v257 = vld [vmem:[%s211 + $0x68] sm:$0xff]
        %v258 = vld [vmem:[%s211 + $0x70] sm:$0xff]
        %v259 = vld [vmem:[%s211 + $0x78] sm:$0xff]
        %v260 = vld [vmem:[%s211 + $0x80] sm:$0xff]
        %v261 = vld [vmem:[%s211 + $0x88] sm:$0xff]
        %v262 = vld [vmem:[%s211 + $0x90] sm:$0xff]
        %v263 = vld [vmem:[%s211 + $0x98] sm:$0xff]
        %v264 = vld [vmem:[%s211 + $0xa0] sm:$0xff]
        %v265 = vld [vmem:[%s211 + $0xa8] sm:$0xff]
        %v266 = vld [vmem:[%s211 + $0xb0] sm:$0xff]
        %v267 = vld [vmem:[%s211 + $0xb8] sm:$0xff]
        %v268 = vld [vmem:[%s211 + $0xc0] sm:$0xff]
        %v269 = vld [vmem:[%s211 + $0xc8] sm:$0xff]
        %v270 = vld [vmem:[%s211 + $0xd0] sm:$0xff]
        %v271 = vld [vmem:[%s211 + $0xd8] sm:$0xff]
        %v272 = vld [vmem:[%s211 + $0xe0] sm:$0xff]
        %v273 = vld [vmem:[%s211 + $0xe8] sm:$0xff]
        %v274 = vld [vmem:[%s211 + $0xf0] sm:$0xff]
        %v275 = vld [vmem:[%s211 + $0xf8] sm:$0xff]
        %v276 = vld [vmem:[#allocation5] sm:$0xf]
        %v277 = vld [vmem:[#allocation7] sm:$0x1]
        %v279 = vlaneseq
        %v280 = vshrl.u32 %v279, 7
        %v281 = vsub.s32 0, %v280
        %v282 = vrot.slane %v277, %v281
        %vm284 = vcmask 31744
        %v286 = vsel %vm284, %v244, 0
        %v289 = vsel %vm284, %v245, 0
        %v292 = vsel %vm284, %v246, 0
        %v295 = vsel %vm284, %v247, 0
        %v298 = vsel %vm284, %v248, 0
        %v301 = vsel %vm284, %v249, 0
        %v304 = vsel %vm284, %v250, 0
        %v307 = vsel %vm284, %v251, 0
        %v310 = vsel %vm284, %v252, 0
        %v313 = vsel %vm284, %v253, 0
        %v316 = vsel %vm284, %v254, 0
        %v319 = vsel %vm284, %v255, 0
        %v322 = vsel %vm284, %v256, 0
        %v325 = vsel %vm284, %v257, 0
        %v328 = vsel %vm284, %v258, 0
        %v331 = vsel %vm284, %v259, 0
        %v334 = vsel %vm284, %v260, 0
        %v337 = vsel %vm284, %v261, 0
        %v340 = vsel %vm284, %v262, 0
        %v343 = vsel %vm284, %v263, 0
        %v346 = vsel %vm284, %v264, 0
        %v349 = vsel %vm284, %v265, 0
        %v352 = vsel %vm284, %v266, 0
        %v355 = vsel %vm284, %v267, 0
        %v358 = vsel %vm284, %v268, 0
        %v361 = vsel %vm284, %v269, 0
        %v364 = vsel %vm284, %v270, 0
        %v367 = vsel %vm284, %v271, 0
        %v370 = vsel %vm284, %v272, 0
        %v373 = vsel %vm284, %v273, 0
        %v376 = vsel %vm284, %v274, 0
        %v379 = vsel %vm284, %v275, 0
        %vm381 = vcmask 1043456
        %v383 = vsel %vm381, %v276, 0
        %385 = vmatprep.subr.mxu0 0.0
        %386 = vmatpush1.msra.mxu0 %v383
        %387 = vmatprep.subr.mxu0 0.0
        %388 = vmatpush1.msra.mxu0 0.0
        %389 = vmatprep.subr.mxu0 0.0
        %390 = vmatpush1.msra.mxu0 0.0
        %391 = vmatprep.subr.mxu0 0.0
        %392 = vmatpush1.msra.mxu0 0.0
        %393 = vmatprep.subr.mxu0 0.0
        %394 = vmatpush1.msra.mxu0 0.0
        %395 = vmatprep.subr.mxu0 0.0
        %396 = vmatpush1.msra.mxu0 0.0
        %397 = vmatprep.subr.mxu0 0.0
        %398 = vmatpush1.msra.mxu0 0.0
        %399 = vmatprep.subr.mxu0 0.0
        %400 = vmatpush1.msra.mxu0 0.0
        %401 = vmatprep.subr.mxu0 0.0
        %402 = vmatpush1.msra.mxu0 0.0
        %403 = vmatprep.subr.mxu0 0.0
        %404 = vmatpush1.msra.mxu0 0.0
        %405 = vmatprep.subr.mxu0 0.0
        %406 = vmatpush1.msra.mxu0 0.0
        %407 = vmatprep.subr.mxu0 0.0
        %408 = vmatpush1.msra.mxu0 0.0
        %409 = vmatprep.subr.mxu0 0.0
        %410 = vmatpush1.msra.mxu0 0.0
        %411 = vmatprep.subr.mxu0 0.0
        %412 = vmatpush1.msra.mxu0 0.0
        %413 = vmatprep.subr.mxu0 0.0
        %414 = vmatpush1.msra.mxu0 0.0
        %415 = vmatprep.subr.mxu0 0.0
        %416 = vmatpush1.msra.mxu0 0.0
        %417 = vmatprep.subr.mxu0 0.0
        %418 = vmatpush1.msra.mxu0 0.0
        %419 = vmatprep.subr.mxu0 0.0
        %420 = vmatpush1.msra.mxu0 0.0
        %421 = vmatprep.subr.mxu0 0.0
        %422 = vmatpush1.msra.mxu0 0.0
        %423 = vmatprep.subr.mxu0 0.0
        %424 = vmatpush1.msra.mxu0 0.0
        %425 = vmatprep.subr.mxu0 0.0
        %426 = vmatpush1.msra.mxu0 0.0
        %427 = vmatprep.subr.mxu0 0.0
        %428 = vmatpush1.msra.mxu0 0.0
        %429 = vmatprep.subr.mxu0 0.0
        %430 = vmatpush1.msra.mxu0 0.0
        %431 = vmatprep.subr.mxu0 0.0
        %432 = vmatpush1.msra.mxu0 0.0
        %433 = vmatprep.subr.mxu0 0.0
        %434 = vmatpush1.msra.mxu0 0.0
        %435 = vmatprep.subr.mxu0 0.0
        %436 = vmatpush1.msra.mxu0 0.0
        %437 = vmatprep.subr.mxu0 0.0
        %438 = vmatpush1.msra.mxu0 0.0
        %439 = vmatprep.subr.mxu0 0.0
        %440 = vmatpush1.msra.mxu0 0.0
        %441 = vmatprep.subr.mxu0 0.0
        %442 = vmatpush1.msra.mxu0 0.0
        %443 = vmatprep.subr.mxu0 0.0
        %444 = vmatpush1.msra.mxu0 0.0
        %445 = vmatprep.subr.mxu0 0.0
        %446 = vmatpush1.msra.mxu0 0.0
        %447 = vmatprep.subr.mxu0 0.0
        %448 = vmatpush1.msra.mxu0 0.0
        %449 = vmatprep.mubr.f32.mxu0 0.0
        %450 = vmatmul.mubr.f32.gmra.mrb[0].mxu0 %v286
        %v451 = vpop.f32.mrb[0].mxu0
        %v452 = vadd.f32 %v282, %v451
        %v453 = vpop.f32.mrb[0].mxu0
        %454 = vmatprep.mubr.f32.mxu0 0.0
        %455 = vmatmul.mubr.f32.gmra.mrb[0].mxu0 %v289
        %v456 = vpop.f32.mrb[0].mxu0
        %v457 = vadd.f32 %v282, %v456
        %v458 = vpop.f32.mrb[0].mxu0
        %459 = vmatprep.mubr.f32.mxu0 0.0
        %460 = vmatmul.mubr.f32.gmra.mrb[0].mxu0 %v292
        %v461 = vpop.f32.mrb[0].mxu0
        %v462 = vadd.f32 %v282, %v461
        %v463 = vpop.f32.mrb[0].mxu0
        %464 = vmatprep.mubr.f32.mxu0 0.0
        %465 = vmatmul.mubr.f32.gmra.mrb[0].mxu0 %v295
        %v466 = vpop.f32.mrb[0].mxu0
        %v467 = vadd.f32 %v282, %v466
        %v468 = vpop.f32.mrb[0].mxu0
        %469 = vmatprep.mubr.f32.mxu0 0.0
        %470 = vmatmul.mubr.f32.gmra.mrb[0].mxu0 %v298
        %v471 = vpop.f32.mrb[0].mxu0
        %v472 = vadd.f32 %v282, %v471
        %v473 = vpop.f32.mrb[0].mxu0
        %474 = vmatprep.mubr.f32.mxu0 0.0
        %475 = vmatmul.mubr.f32.gmra.mrb[0].mxu0 %v301
        %v476 = vpop.f32.mrb[0].mxu0
        %v477 = vadd.f32 %v282, %v476
        %v478 = vpop.f32.mrb[0].mxu0
        %479 = vmatprep.mubr.f32.mxu0 0.0
        %480 = vmatmul.mubr.f32.gmra.mrb[0].mxu0 %v304
        %v481 = vpop.f32.mrb[0].mxu0
        %v482 = vadd.f32 %v282, %v481
        %v483 = vpop.f32.mrb[0].mxu0
        %484 = vmatprep.mubr.f32.mxu0 0.0
        %485 = vmatmul.mubr.f32.gmra.mrb[0].mxu0 %v307
        %v486 = vpop.f32.mrb[0].mxu0
        %v487 = vadd.f32 %v282, %v486
        %v488 = vpop.f32.mrb[0].mxu0
        %489 = vmatprep.mubr.f32.mxu0 0.0
        %490 = vmatmul.mubr.f32.gmra.mrb[0].mxu0 %v310
        %v491 = vpop.f32.mrb[0].mxu0
        %v492 = vadd.f32 %v282, %v491
        %v493 = vpop.f32.mrb[0].mxu0
        %494 = vmatprep.mubr.f32.mxu0 0.0
        %495 = vmatmul.mubr.f32.gmra.mrb[0].mxu0 %v313
        %v496 = vpop.f32.mrb[0].mxu0
        %v497 = vadd.f32 %v282, %v496
        %v498 = vpop.f32.mrb[0].mxu0
        %499 = vmatprep.mubr.f32.mxu0 0.0
        %500 = vmatmul.mubr.f32.gmra.mrb[0].mxu0 %v316
        %v501 = vpop.f32.mrb[0].mxu0
        %v502 = vadd.f32 %v282, %v501
        %v503 = vpop.f32.mrb[0].mxu0
        %504 = vmatprep.mubr.f32.mxu0 0.0
        %505 = vmatmul.mubr.f32.gmra.mrb[0].mxu0 %v319
        %v506 = vpop.f32.mrb[0].mxu0
        %v507 = vadd.f32 %v282, %v506
        %v508 = vpop.f32.mrb[0].mxu0
        %509 = vmatprep.mubr.f32.mxu0 0.0
        %510 = vmatmul.mubr.f32.gmra.mrb[0].mxu0 %v322
        %v511 = vpop.f32.mrb[0].mxu0
        %v512 = vadd.f32 %v282, %v511
        %v513 = vpop.f32.mrb[0].mxu0
        %514 = vmatprep.mubr.f32.mxu0 0.0
        %515 = vmatmul.mubr.f32.gmra.mrb[0].mxu0 %v325
        %v516 = vpop.f32.mrb[0].mxu0
        %v517 = vadd.f32 %v282, %v516
        %v518 = vpop.f32.mrb[0].mxu0
        %519 = vmatprep.mubr.f32.mxu0 0.0
        %520 = vmatmul.mubr.f32.gmra.mrb[0].mxu0 %v328
        %v521 = vpop.f32.mrb[0].mxu0
        %v522 = vadd.f32 %v282, %v521
        %v523 = vpop.f32.mrb[0].mxu0
        %524 = vmatprep.mubr.f32.mxu0 0.0
        %525 = vmatmul.mubr.f32.gmra.mrb[0].mxu0 %v331
        %v526 = vpop.f32.mrb[0].mxu0
        %v527 = vadd.f32 %v282, %v526
        %v528 = vpop.f32.mrb[0].mxu0
        %529 = vmatprep.mubr.f32.mxu0 0.0
        %530 = vmatmul.mubr.f32.gmra.mrb[0].mxu0 %v334
        %v531 = vpop.f32.mrb[0].mxu0
        %v532 = vadd.f32 %v282, %v531
        %v533 = vpop.f32.mrb[0].mxu0
        %534 = vmatprep.mubr.f32.mxu0 0.0
        %535 = vmatmul.mubr.f32.gmra.mrb[0].mxu0 %v337
        %v536 = vpop.f32.mrb[0].mxu0
        %v537 = vadd.f32 %v282, %v536
        %v538 = vpop.f32.mrb[0].mxu0
        %539 = vmatprep.mubr.f32.mxu0 0.0
        %540 = vmatmul.mubr.f32.gmra.mrb[0].mxu0 %v340
        %v541 = vpop.f32.mrb[0].mxu0
        %v542 = vadd.f32 %v282, %v541
        %v543 = vpop.f32.mrb[0].mxu0
        %544 = vmatprep.mubr.f32.mxu0 0.0
        %545 = vmatmul.mubr.f32.gmra.mrb[0].mxu0 %v343
        %v546 = vpop.f32.mrb[0].mxu0
        %v547 = vadd.f32 %v282, %v546
        %v548 = vpop.f32.mrb[0].mxu0
        %549 = vmatprep.mubr.f32.mxu0 0.0
        %550 = vmatmul.mubr.f32.gmra.mrb[0].mxu0 %v346
        %v551 = vpop.f32.mrb[0].mxu0
        %v552 = vadd.f32 %v282, %v551
        %v553 = vpop.f32.mrb[0].mxu0
        %554 = vmatprep.mubr.f32.mxu0 0.0
        %555 = vmatmul.mubr.f32.gmra.mrb[0].mxu0 %v349
        %v556 = vpop.f32.mrb[0].mxu0
        %v557 = vadd.f32 %v282, %v556
        %v558 = vpop.f32.mrb[0].mxu0
        %559 = vmatprep.mubr.f32.mxu0 0.0
        %560 = vmatmul.mubr.f32.gmra.mrb[0].mxu0 %v352
        %v561 = vpop.f32.mrb[0].mxu0
        %v562 = vadd.f32 %v282, %v561
        %v563 = vpop.f32.mrb[0].mxu0
        %564 = vmatprep.mubr.f32.mxu0 0.0
        %565 = vmatmul.mubr.f32.gmra.mrb[0].mxu0 %v355
        %v566 = vpop.f32.mrb[0].mxu0
        %v567 = vadd.f32 %v282, %v566
        %v568 = vpop.f32.mrb[0].mxu0
        %569 = vmatprep.mubr.f32.mxu0 0.0
        %570 = vmatmul.mubr.f32.gmra.mrb[0].mxu0 %v358
        %v571 = vpop.f32.mrb[0].mxu0
        %v572 = vadd.f32 %v282, %v571
        %v573 = vpop.f32.mrb[0].mxu0
        %574 = vmatprep.mubr.f32.mxu0 0.0
        %575 = vmatmul.mubr.f32.gmra.mrb[0].mxu0 %v361
        %v576 = vpop.f32.mrb[0].mxu0
        %v577 = vadd.f32 %v282, %v576
        %v578 = vpop.f32.mrb[0].mxu0
        %579 = vmatprep.mubr.f32.mxu0 0.0
        %580 = vmatmul.mubr.f32.gmra.mrb[0].mxu0 %v364
        %v581 = vpop.f32.mrb[0].mxu0
        %v582 = vadd.f32 %v282, %v581
        %v583 = vpop.f32.mrb[0].mxu0
        %584 = vmatprep.mubr.f32.mxu0 0.0
        %585 = vmatmul.mubr.f32.gmra.mrb[0].mxu0 %v367
        %v586 = vpop.f32.mrb[0].mxu0
        %v587 = vadd.f32 %v282, %v586
        %v588 = vpop.f32.mrb[0].mxu0
        %589 = vmatprep.mubr.f32.mxu0 0.0
        %590 = vmatmul.mubr.f32.gmra.mrb[0].mxu0 %v370
        %v591 = vpop.f32.mrb[0].mxu0
        %v592 = vadd.f32 %v282, %v591
        %v593 = vpop.f32.mrb[0].mxu0
        %594 = vmatprep.mubr.f32.mxu0 0.0
        %595 = vmatmul.mubr.f32.gmra.mrb[0].mxu0 %v373
        %v596 = vpop.f32.mrb[0].mxu0
        %v597 = vadd.f32 %v282, %v596
        %v598 = vpop.f32.mrb[0].mxu0
        %599 = vmatprep.mubr.f32.mxu0 0.0
        %600 = vmatmul.mubr.f32.gmra.mrb[0].mxu0 %v376
        %v601 = vpop.f32.mrb[0].mxu0
        %v602 = vadd.f32 %v282, %v601
        %v603 = vpop.f32.mrb[0].mxu0
        %604 = vmatprep.mubr.f32.mxu0 0.0
        %605 = vmatmul.mubr.f32.gmra.mrb[0].mxu0 %v379
        %v606 = vpop.f32.mrb[0].mxu0
        %v607 = vadd.f32 %v282, %v606
        %v608 = vpop.f32.mrb[0].mxu0
        %609 = vdwg.mxu0
        %v610 = vmax.f32 %v452, 0.0
        %v611 = vmax.f32 %v457, 0.0
        %v612 = vmax.f32 %v462, 0.0
        %v613 = vmax.f32 %v467, 0.0
        %v614 = vmax.f32 %v472, 0.0
        %v615 = vmax.f32 %v477, 0.0
        %v616 = vmax.f32 %v482, 0.0
        %v617 = vmax.f32 %v487, 0.0
        %v618 = vmax.f32 %v492, 0.0
        %v619 = vmax.f32 %v497, 0.0
        %v620 = vmax.f32 %v502, 0.0
        %v621 = vmax.f32 %v507, 0.0
        %v622 = vmax.f32 %v512, 0.0
        %v623 = vmax.f32 %v517, 0.0
        %v624 = vmax.f32 %v522, 0.0
        %v625 = vmax.f32 %v527, 0.0
        %v626 = vmax.f32 %v532, 0.0
        %v627 = vmax.f32 %v537, 0.0
        %v628 = vmax.f32 %v542, 0.0
        %v629 = vmax.f32 %v547, 0.0
        %v630 = vmax.f32 %v552, 0.0
        %v631 = vmax.f32 %v557, 0.0
        %v632 = vmax.f32 %v562, 0.0
        %v633 = vmax.f32 %v567, 0.0
        %v634 = vmax.f32 %v572, 0.0
        %v635 = vmax.f32 %v577, 0.0
        %v636 = vmax.f32 %v582, 0.0
        %v637 = vmax.f32 %v587, 0.0
        %v638 = vmax.f32 %v592, 0.0
        %v639 = vmax.f32 %v597, 0.0
        %v640 = vmax.f32 %v602, 0.0
        %v641 = vmax.f32 %v607, 0.0
        %642 = vst.msk [vmem:[%s241] sm:$0xff] %vm284, %v610
        %643 = vst.msk [vmem:[%s241 + $0x8] sm:$0xff] %vm284, %v611
        %644 = vst.msk [vmem:[%s241 + $0x10] sm:$0xff] %vm284, %v612
        %645 = vst.msk [vmem:[%s241 + $0x18] sm:$0xff] %vm284, %v613
        %646 = vst.msk [vmem:[%s241 + $0x20] sm:$0xff] %vm284, %v614
        %647 = vst.msk [vmem:[%s241 + $0x28] sm:$0xff] %vm284, %v615
        %648 = vst.msk [vmem:[%s241 + $0x30] sm:$0xff] %vm284, %v616
        %649 = vst.msk [vmem:[%s241 + $0x38] sm:$0xff] %vm284, %v617
        %650 = vst.msk [vmem:[%s241 + $0x40] sm:$0xff] %vm284, %v618
        %651 = vst.msk [vmem:[%s241 + $0x48] sm:$0xff] %vm284, %v619
        %652 = vst.msk [vmem:[%s241 + $0x50] sm:$0xff] %vm284, %v620
        %653 = vst.msk [vmem:[%s241 + $0x58] sm:$0xff] %vm284, %v621
        %654 = vst.msk [vmem:[%s241 + $0x60] sm:$0xff] %vm284, %v622
        %655 = vst.msk [vmem:[%s241 + $0x68] sm:$0xff] %vm284, %v623
        %656 = vst.msk [vmem:[%s241 + $0x70] sm:$0xff] %vm284, %v624
        %657 = vst.msk [vmem:[%s241 + $0x78] sm:$0xff] %vm284, %v625
        %658 = vst.msk [vmem:[%s241 + $0x80] sm:$0xff] %vm284, %v626
        %659 = vst.msk [vmem:[%s241 + $0x88] sm:$0xff] %vm284, %v627
        %660 = vst.msk [vmem:[%s241 + $0x90] sm:$0xff] %vm284, %v628
        %661 = vst.msk [vmem:[%s241 + $0x98] sm:$0xff] %vm284, %v629
        %662 = vst.msk [vmem:[%s241 + $0xa0] sm:$0xff] %vm284, %v630
        %663 = vst.msk [vmem:[%s241 + $0xa8] sm:$0xff] %vm284, %v631
        %664 = vst.msk [vmem:[%s241 + $0xb0] sm:$0xff] %vm284, %v632
        %665 = vst.msk [vmem:[%s241 + $0xb8] sm:$0xff] %vm284, %v633
        %666 = vst.msk [vmem:[%s241 + $0xc0] sm:$0xff] %vm284, %v634
        %667 = vst.msk [vmem:[%s241 + $0xc8] sm:$0xff] %vm284, %v635
        %668 = vst.msk [vmem:[%s241 + $0xd0] sm:$0xff] %vm284, %v636
        %669 = vst.msk [vmem:[%s241 + $0xd8] sm:$0xff] %vm284, %v637
        %670 = vst.msk [vmem:[%s241 + $0xe0] sm:$0xff] %vm284, %v638
        %671 = vst.msk [vmem:[%s241 + $0xe8] sm:$0xff] %vm284, %v639
        %672 = vst.msk [vmem:[%s241 + $0xf0] sm:$0xff] %vm284, %v640
        %673 = vst.msk [vmem:[%s241 + $0xf8] sm:$0xff] %vm284, %v641
        %s674 = sand.u32 %s121, 1
        %s675 = scalar_lea.sflag [#allocation4], %s674
        %s676 = sand.u32 %s121, 1
        %s677 = smul.addr %s676, 256
        %s678 = scalar_lea.vmem [#allocation8], %s677
        // Predicated region
        $region45: #{tpu_custom_call.1} parent=31 // pred_check
          %p679 = pneg %p131
        $region46: #{tpu_custom_call.1} parent=31 // pred_check_branch
          %681 = sbr.rel (%p679) target = $region48
        $region47: #{tpu_custom_call.1} parent=31 // pred_region
          %s682 = smul.u32 32, %s26
          %s684 = ssub.s32 4096, 4096
          %685 = vsyncadd %s675, %s684
          %s686 = sadd.s32 %s25, %s682
          %s687 = smul.addr %s686, 128
          %s688 = scalar_lea.hbm %s3, %s687
          %s689 = sshll.u32 %s678, 4
          %s690 = int_to_ptr.vmem [resolvable:$true] %s689
          %695 = dma.vmem_to_hbm [thread:$0]  %s690, 4096, %s688, %s675, 128, 128, 8
        $region48: #{tpu_custom_call.1} parent=31 // pred_fallthru
          _
      $region32: #{tpu_custom_call.1} parent=5 // pred_fallthru
        _
      %p696 = scmp.le.s32.totalorder 2, %s16
      // Predicated region
      $region49: #{tpu_custom_call.1} parent=5 // pred_check
        %p697 = pneg %p696
      $region50: #{tpu_custom_call.1} parent=5 // pred_check_branch
        %699 = sbr.rel (%p697) target = $region52
      $region51: #{tpu_custom_call.1} parent=5 // pred_region
        %s700 = ssub.s32 %s16, 2
        // Predicated region
        $region53: #{tpu_custom_call.1} parent=51 // pred_check
          %p701 = pneg %p137
        $region54: #{tpu_custom_call.1} parent=51 // pred_check_branch
          %703 = sbr.rel (%p701) target = $region56
        $region55: #{tpu_custom_call.1} parent=51 // pred_region
          %s704 = sand.u32 %s122, 1
          %s705 = scalar_lea.sflag [#allocation4], %s704
          %s706 = sand.u32 %s122, 1
          %s707 = smul.addr %s706, 256
          %s708 = scalar_lea.vmem [#allocation8], %s707
          %709 = dma.done %s705, 4096
        $region56: #{tpu_custom_call.1} parent=51 // pred_fallthru
          _
      $region52: #{tpu_custom_call.1} parent=5 // pred_fallthru
        _
    $region6: #{tpu_custom_call.1} parent=1 // loop_footer
      %s20 = sadd.s32 1, %s16
    $region7: #{tpu_custom_call.1} parent=1 // loop_footer_branch
      %15 = sbr.rel target = $region3
    $region8: #{tpu_custom_call.1} parent=1 // loop_exit
      _
    %710 = vsyncpa [#allocation3], 1
    %s711 = scalar_lea.sflag [#allocation3], 1
    %712 = vsyncpa %s711, 1
    %713 = vsyncpa [#allocation6], 1
    %714 = vsyncpa [#allocation4], 1
    %s715 = scalar_lea.sflag [#allocation4], 1
    %716 = vsyncpa %s715, 1

</llo_original>
